<compile_context>
chip_gen: v7x
topology: tpu7x:2x2x1
jax: 0.10.0
libtpu: 0.0.40
codegen_flags: <defaults>
</compile_context>

<pallas_src>
import functools
import math

import numpy as np
import jax
import jax.numpy as jnp
from jax import lax
from jax.experimental import pallas as pl
from jax.experimental.pallas import tpu as pltpu

# CM conv configurations (from the PyTorch module)
K_SIZE = (1, 3, 3, 3, 5, 5, 5)
DILA   = (1, 1, 2, 3, 1, 2, 3)
PADS   = (0, 1, 2, 3, 2, 4, 6)
N_K = len(K_SIZE)
GLIMPSE = 2


def _build_band(R: int) -> jnp.ndarray:
    """Build the (N_K*R, R) ones-banded matrix for the dilated ones-filter convs.

    Row j*R + g of (band @ x) equals the conv row that torch's kernel-major
    cat(dim=1) followed by .view(bs, num_r, 7, -1) places at [g, j], i.e. the
    conv of kernel (g*N_K + j)//R evaluated at region (g*N_K + j)%R.  Grouping
    the rows j-major keeps every j-block a sublane-tile-aligned (R, H) slice.
    """
    band = np.zeros((N_K * R, R), np.float32)
    for g in range(R):
        for j in range(N_K):
            flat = g * N_K + j            # torch .view flat index
            k, r = flat // R, flat % R    # which conv / which region it really holds
            ks, d, p = K_SIZE[k], DILA[k], PADS[k]
            for t in range(ks):
                c = r + t * d - p
                if 0 <= c < R:
                    band[j * R + g, c] += 1.0
    return jnp.asarray(band)


# ---------------------------------------------------------------------------
# Fused CAU kernel: CM banded-conv -> CM attention -> HA (QKV + 2-glimpse attn + fc)
# ---------------------------------------------------------------------------
def _cau_kernel(x_ref, band_ref, wfc_ref, bfc_ref, wqkv_ref, bqkv_ref,
                wf_ref, bf_ref, o_ref, *, R, H, head_size, glimpse):
    x = x_ref[0]                                                       # (R, H)

    # ---- CM: dilated ones-filter conv1d == one banded MXU matmul, then ReLU.
    xx = jnp.maximum(
        jnp.dot(band_ref[...], x, preferred_element_type=jnp.float32), 0.0)   # (7R, H)

    # ---- CM attention: Linear(H,1) scores, softmax over the 7 kernel slots,
    #      attention-weighted sum.  All slices below are tile-aligned (j*R is a
    #      multiple of 8), so no repacking.
    s_all = jnp.sum(xx * wfc_ref[...], axis=-1, keepdims=True) + bfc_ref[...]  # (7R, 1)
    sj = [s_all[j * R:(j + 1) * R, :] for j in range(N_K)]             # 7 x (R, 1)
    m = sj[0]
    for j in range(1, N_K):
        m = jnp.maximum(m, sj[j])
    ej = [jnp.exp(s - m) for s in sj]
    denom = ej[0]
    for j in range(1, N_K):
        denom = denom + ej[j]
    inv = pl.reciprocal(denom, approx=True)                            # (R, 1)
    cm_x = (ej[0] * inv) * xx[0:R, :]
    for j in range(1, N_K):
        cm_x = cm_x + (ej[j] * inv) * xx[j * R:(j + 1) * R, :]         # (R, H)

    # ---- HA: fused QKV projection (one (H, 3H) matmul), glimpse self-attn,
    #      and out-projection folded per-glimpse: cat @ Wf == sum_g h_g @ Wf[g-rows].
    qkv = jnp.dot(cm_x, wqkv_ref[...],
                  preferred_element_type=jnp.float32) + bqkv_ref[...]  # (R, 3H)
    K = qkv[:, 0:H]
    Q = qkv[:, H:2 * H]
    V = qkv[:, 2 * H:3 * H]
    scale = 1.0 / math.sqrt(head_size)
    acc = None
    for g in range(glimpse):
        lo, hi = g * head_size, (g + 1) * head_size
        qg, kg, vg = Q[:, lo:hi], K[:, lo:hi], V[:, lo:hi]
        s = lax.dot_general(qg, kg, (((1,), (1,)), ((), ())),
                            preferred_element_type=jnp.float32) * scale       # (R, R)
        s = s - jnp.max(s, axis=-1, keepdims=True)
        e = jnp.exp(s)
        p = e * pl.reciprocal(jnp.sum(e, axis=-1, keepdims=True), approx=True)
        # TODO(synk): nn.Dropout(0.1) on p is eval-mode identity here.
        hg = jnp.dot(p, vg, preferred_element_type=jnp.float32)               # (R, hd)
        contrib = jnp.dot(hg, wf_ref[lo:hi, :],
                          preferred_element_type=jnp.float32)                 # (R, H)
        acc = contrib if acc is None else acc + contrib
    o_ref[0] = acc + bf_ref[...]


def cau_forward(x, params):
    B, R, H = x.shape
    band = _build_band(R)
    # Stack Ws1 | Ws2 | Ws3 into one (H, 3H) weight / (1, 3H) bias (one MXU pass).
    wqkv = jnp.concatenate([params["w1"], params["w2"], params["w3"]], axis=1)
    bqkv = jnp.concatenate([params["b1"], params["b2"], params["b3"]], axis=1)

    kern = functools.partial(_cau_kernel, R=R, H=H,
                             head_size=H // GLIMPSE, glimpse=GLIMPSE)
    const2 = lambda b: (0, 0)
    return pl.pallas_call(
        kern,
        out_shape=jax.ShapeDtypeStruct((B, R, H), x.dtype),
        grid=(B,),
        in_specs=[
            pl.BlockSpec((1, R, H), lambda b: (b, 0, 0)),   # x (per-batch tile)
            pl.BlockSpec((N_K * R, R), const2),             # banded ones-conv matrix
            pl.BlockSpec((1, H), const2),                   # convs_fc weight
            pl.BlockSpec((1, 1), const2),                   # convs_fc bias
            pl.BlockSpec((H, 3 * H), const2),               # stacked Ws1|Ws2|Ws3
            pl.BlockSpec((1, 3 * H), const2),               # stacked biases
            pl.BlockSpec((H, H), const2),                   # fc weight
            pl.BlockSpec((1, H), const2),                   # fc bias
        ],
        out_specs=pl.BlockSpec((1, R, H), lambda b: (b, 0, 0)),
        compiler_params=pltpu.CompilerParams(
            dimension_semantics=("parallel",)),             # keep >=2 parallel steps (v7x)
    )(x, band, params["convs_fc_w"], params["convs_fc_b"],
      wqkv, bqkv, params["wf"], params["bf"])


# ---------------------------------------------------------------------------
# Pure-JAX reference (faithful to the torch module, exact softmax division)
# ---------------------------------------------------------------------------
def cau_ref(x, params):
    B, R, H = x.shape
    chunks = []
    for k, d, p in zip(K_SIZE, DILA, PADS):
        xp = jnp.pad(x, ((0, 0), (p, p), (0, 0)))
        acc = sum(xp[:, t * d:t * d + R, :] for t in range(k))
        chunks.append(jax.nn.relu(acc))
    xx = jnp.concatenate(chunks, axis=1).reshape(B, R, N_K, H)
    scores = jnp.einsum("brkh,h->brk", xx, params["convs_fc_w"][0]) + params["convs_fc_b"][0, 0]
    att = jax.nn.softmax(scores, axis=-1)
    cm_x = jnp.einsum("brk,brkh->brh", att, xx)
    K_ = cm_x @ params["w1"] + params["b1"]
    Q_ = cm_x @ params["w2"] + params["b2"]
    V_ = cm_x @ params["w3"] + params["b3"]
    hd = H // GLIMPSE
    outs = []
    for g in range(GLIMPSE):
        sl = slice(g * hd, (g + 1) * hd)
        s = jnp.einsum("brd,bsd->brs", Q_[..., sl], K_[..., sl]) / math.sqrt(hd)
        p = jax.nn.softmax(s, axis=-1)
        outs.append(jnp.einsum("brs,bsd->brd", p, V_[..., sl]))
    cat = jnp.concatenate(outs, axis=-1)
    return cat @ params["wf"] + params["bf"]


# ---------------------------------------------------------------------------
if __name__ == "__main__":
    B, R, H = 2, 8, 64            # batch, num_regions, num_hid

    key = jax.random.PRNGKey(0)
    k = jax.random.split(key, 12)
    params = {
        # CM: convs_fc = Linear(H, 1)
        "convs_fc_w": 0.1 * jax.random.normal(k[0], (1, H), jnp.float32),
        "convs_fc_b": jnp.full((1, 1), 0.01, jnp.float32),
        # HA: Ws1/Ws2/Ws3/fc = Linear(H, H); stored as (in, out)
        "w1": 0.1 * jax.random.normal(k[1], (H, H), jnp.float32),
        "b1": 0.1 * jax.random.normal(k[2], (1, H), jnp.float32),
        "w2": 0.1 * jax.random.normal(k[3], (H, H), jnp.float32),
        "b2": 0.1 * jax.random.normal(k[4], (1, H), jnp.float32),
        "w3": 0.1 * jax.random.normal(k[5], (H, H), jnp.float32),
        "b3": 0.1 * jax.random.normal(k[6], (1, H), jnp.float32),
        "wf": 0.1 * jax.random.normal(k[7], (H, H), jnp.float32),
        "bf": 0.1 * jax.random.normal(k[8], (1, H), jnp.float32),
    }
    x = jax.random.normal(k[9], (B, R, H), jnp.float32)

    fwd = jax.jit(cau_forward)
    out = jax.block_until_ready(fwd(x, params))
    ref = jax.block_until_ready(cau_ref(x, params))

    assert out.shape == (B, R, H), out.shape
    # Tolerance accounts for pl.reciprocal(approx=True) in the two softmax
    # denominators (approx-reciprocal error propagates through the attention
    # weights); semantic errors would be orders of magnitude larger.
    assert jnp.allclose(out, ref, rtol=1e-2, atol=1e-2), float(jnp.max(jnp.abs(out - ref)))
    print("KERNEL_OK")
</pallas_src>

<mosaic_0001>
module attributes {stable_mosaic.version = 11 : i64} {
  func.func @_cau_kernel(%arg0: i32, %arg1: memref<1x8x64xf32, #tpu.memory_space<vmem>>, %arg2: memref<56x8xf32, #tpu.memory_space<vmem>>, %arg3: memref<1x64xf32, #tpu.memory_space<vmem>>, %arg4: memref<1x1xf32, #tpu.memory_space<vmem>>, %arg5: memref<64x192xf32, #tpu.memory_space<vmem>>, %arg6: memref<1x192xf32, #tpu.memory_space<vmem>>, %arg7: memref<64x64xf32, #tpu.memory_space<vmem>>, %arg8: memref<1x64xf32, #tpu.memory_space<vmem>>, %arg9: memref<1x8x64xf32, #tpu.memory_space<vmem>>) attributes {dimension_semantics = [#tpu.dimension_semantics<parallel>], iteration_bounds = array<i64: 2>, scalar_prefetch = 0 : i64, scratch_operands = 0 : i64, tpu.core_type = #tpu.core_type<tc>, window_params = [{transform_indices = @transform_0, window_bounds = array<i64: 1, 8, 64>}, {pipeline_mode = #tpu.pipeline_mode<synchronous>, transform_indices = @transform_1, window_bounds = array<i64: 56, 8>}, {pipeline_mode = #tpu.pipeline_mode<synchronous>, transform_indices = @transform_2, window_bounds = array<i64: 1, 64>}, {pipeline_mode = #tpu.pipeline_mode<synchronous>, transform_indices = @transform_3, window_bounds = array<i64: 1, 1>}, {pipeline_mode = #tpu.pipeline_mode<synchronous>, transform_indices = @transform_4, window_bounds = array<i64: 64, 192>}, {pipeline_mode = #tpu.pipeline_mode<synchronous>, transform_indices = @transform_5, window_bounds = array<i64: 1, 192>}, {pipeline_mode = #tpu.pipeline_mode<synchronous>, transform_indices = @transform_6, window_bounds = array<i64: 64, 64>}, {pipeline_mode = #tpu.pipeline_mode<synchronous>, transform_indices = @transform_7, window_bounds = array<i64: 1, 64>}, {transform_indices = @transform_8, window_bounds = array<i64: 1, 8, 64>}]} {
    %c0 = arith.constant 0 : index
    %c0_0 = arith.constant 0 : index
    %c0_1 = arith.constant 0 : index
    %0 = vector.load %arg1[%c0, %c0_0, %c0_1] : memref<1x8x64xf32, #tpu.memory_space<vmem>>, vector<1x8x64xf32>
    %1 = vector.shape_cast %0 : vector<1x8x64xf32> to vector<8x64xf32>
    %c0_2 = arith.constant 0 : index
    %c0_3 = arith.constant 0 : index
    %2 = vector.load %arg2[%c0_2, %c0_3] : memref<56x8xf32, #tpu.memory_space<vmem>>, vector<56x8xf32>
    %cst = arith.constant dense<0.000000e+00> : vector<56x64xf32>
    %3 = tpu.matmul %2, %1, %cst {dimension_numbers = #tpu.dot_dimension_numbers<[1], [0], [0], [1], [0, 0, 1, 1], [], []>} : vector<56x8xf32>, vector<8x64xf32>, vector<56x64xf32> -> vector<56x64xf32>
    %cst_4 = arith.constant 0.000000e+00 : f32
    %4 = vector.broadcast %cst_4 : f32 to vector<56x64xf32>
    %5 = arith.maximumf %3, %4 : vector<56x64xf32>
    %c0_5 = arith.constant 0 : index
    %c0_6 = arith.constant 0 : index
    %6 = vector.load %arg3[%c0_5, %c0_6] : memref<1x64xf32, #tpu.memory_space<vmem>>, vector<1x64xf32>
    %7 = vector.broadcast %6 : vector<1x64xf32> to vector<56x64xf32>
    %8 = arith.mulf %5, %7 : vector<56x64xf32>
    %cst_7 = arith.constant dense<0.000000e+00> : vector<56xf32>
    %9 = vector.multi_reduction <add>, %8, %cst_7 [1] : vector<56x64xf32> to vector<56xf32>
    %10 = vector.shape_cast %9 : vector<56xf32> to vector<56x1xf32>
    %c0_8 = arith.constant 0 : index
    %c0_9 = arith.constant 0 : index
    %11 = vector.load %arg4[%c0_8, %c0_9] : memref<1x1xf32, #tpu.memory_space<vmem>>, vector<1x1xf32>
    %12 = vector.broadcast %11 : vector<1x1xf32> to vector<56x1xf32>
    %13 = arith.addf %10, %12 : vector<56x1xf32>
    %14 = vector.extract_strided_slice %13 {offsets = [0, 0], sizes = [8, 1], strides = [1, 1]} : vector<56x1xf32> to vector<8x1xf32>
    %15 = vector.extract_strided_slice %13 {offsets = [8, 0], sizes = [8, 1], strides = [1, 1]} : vector<56x1xf32> to vector<8x1xf32>
    %16 = vector.extract_strided_slice %13 {offsets = [16, 0], sizes = [8, 1], strides = [1, 1]} : vector<56x1xf32> to vector<8x1xf32>
    %17 = vector.extract_strided_slice %13 {offsets = [24, 0], sizes = [8, 1], strides = [1, 1]} : vector<56x1xf32> to vector<8x1xf32>
    %18 = vector.extract_strided_slice %13 {offsets = [32, 0], sizes = [8, 1], strides = [1, 1]} : vector<56x1xf32> to vector<8x1xf32>
    %19 = vector.extract_strided_slice %13 {offsets = [40, 0], sizes = [8, 1], strides = [1, 1]} : vector<56x1xf32> to vector<8x1xf32>
    %20 = vector.extract_strided_slice %13 {offsets = [48, 0], sizes = [8, 1], strides = [1, 1]} : vector<56x1xf32> to vector<8x1xf32>
    %21 = arith.maximumf %14, %15 : vector<8x1xf32>
    %22 = arith.maximumf %21, %16 : vector<8x1xf32>
    %23 = arith.maximumf %22, %17 : vector<8x1xf32>
    %24 = arith.maximumf %23, %18 : vector<8x1xf32>
    %25 = arith.maximumf %24, %19 : vector<8x1xf32>
    %26 = arith.maximumf %25, %20 : vector<8x1xf32>
    %27 = arith.subf %14, %26 : vector<8x1xf32>
    %28 = math.exp %27 : vector<8x1xf32>
    %29 = arith.subf %15, %26 : vector<8x1xf32>
    %30 = math.exp %29 : vector<8x1xf32>
    %31 = arith.subf %16, %26 : vector<8x1xf32>
    %32 = math.exp %31 : vector<8x1xf32>
    %33 = arith.subf %17, %26 : vector<8x1xf32>
    %34 = math.exp %33 : vector<8x1xf32>
    %35 = arith.subf %18, %26 : vector<8x1xf32>
    %36 = math.exp %35 : vector<8x1xf32>
    %37 = arith.subf %19, %26 : vector<8x1xf32>
    %38 = math.exp %37 : vector<8x1xf32>
    %39 = arith.subf %20, %26 : vector<8x1xf32>
    %40 = math.exp %39 : vector<8x1xf32>
    %41 = arith.addf %28, %30 : vector<8x1xf32>
    %42 = arith.addf %41, %32 : vector<8x1xf32>
    %43 = arith.addf %42, %34 : vector<8x1xf32>
    %44 = arith.addf %43, %36 : vector<8x1xf32>
    %45 = arith.addf %44, %38 : vector<8x1xf32>
    %46 = arith.addf %45, %40 : vector<8x1xf32>
    %47 = tpu.reciprocal %46 {approx = true} : vector<8x1xf32> -> vector<8x1xf32>
    %48 = arith.mulf %28, %47 : vector<8x1xf32>
    %49 = vector.extract_strided_slice %5 {offsets = [0, 0], sizes = [8, 64], strides = [1, 1]} : vector<56x64xf32> to vector<8x64xf32>
    %50 = vector.broadcast %48 : vector<8x1xf32> to vector<8x64xf32>
    %51 = arith.mulf %50, %49 : vector<8x64xf32>
    %52 = arith.mulf %30, %47 : vector<8x1xf32>
    %53 = vector.extract_strided_slice %5 {offsets = [8, 0], sizes = [8, 64], strides = [1, 1]} : vector<56x64xf32> to vector<8x64xf32>
    %54 = vector.broadcast %52 : vector<8x1xf32> to vector<8x64xf32>
    %55 = arith.mulf %54, %53 : vector<8x64xf32>
    %56 = arith.addf %51, %55 : vector<8x64xf32>
    %57 = arith.mulf %32, %47 : vector<8x1xf32>
    %58 = vector.extract_strided_slice %5 {offsets = [16, 0], sizes = [8, 64], strides = [1, 1]} : vector<56x64xf32> to vector<8x64xf32>
    %59 = vector.broadcast %57 : vector<8x1xf32> to vector<8x64xf32>
    %60 = arith.mulf %59, %58 : vector<8x64xf32>
    %61 = arith.addf %56, %60 : vector<8x64xf32>
    %62 = arith.mulf %34, %47 : vector<8x1xf32>
    %63 = vector.extract_strided_slice %5 {offsets = [24, 0], sizes = [8, 64], strides = [1, 1]} : vector<56x64xf32> to vector<8x64xf32>
    %64 = vector.broadcast %62 : vector<8x1xf32> to vector<8x64xf32>
    %65 = arith.mulf %64, %63 : vector<8x64xf32>
    %66 = arith.addf %61, %65 : vector<8x64xf32>
    %67 = arith.mulf %36, %47 : vector<8x1xf32>
    %68 = vector.extract_strided_slice %5 {offsets = [32, 0], sizes = [8, 64], strides = [1, 1]} : vector<56x64xf32> to vector<8x64xf32>
    %69 = vector.broadcast %67 : vector<8x1xf32> to vector<8x64xf32>
    %70 = arith.mulf %69, %68 : vector<8x64xf32>
    %71 = arith.addf %66, %70 : vector<8x64xf32>
    %72 = arith.mulf %38, %47 : vector<8x1xf32>
    %73 = vector.extract_strided_slice %5 {offsets = [40, 0], sizes = [8, 64], strides = [1, 1]} : vector<56x64xf32> to vector<8x64xf32>
    %74 = vector.broadcast %72 : vector<8x1xf32> to vector<8x64xf32>
    %75 = arith.mulf %74, %73 : vector<8x64xf32>
    %76 = arith.addf %71, %75 : vector<8x64xf32>
    %77 = arith.mulf %40, %47 : vector<8x1xf32>
    %78 = vector.extract_strided_slice %5 {offsets = [48, 0], sizes = [8, 64], strides = [1, 1]} : vector<56x64xf32> to vector<8x64xf32>
    %79 = vector.broadcast %77 : vector<8x1xf32> to vector<8x64xf32>
    %80 = arith.mulf %79, %78 : vector<8x64xf32>
    %81 = arith.addf %76, %80 : vector<8x64xf32>
    %c0_10 = arith.constant 0 : index
    %c0_11 = arith.constant 0 : index
    %82 = vector.load %arg5[%c0_10, %c0_11] : memref<64x192xf32, #tpu.memory_space<vmem>>, vector<64x192xf32>
    %cst_12 = arith.constant dense<0.000000e+00> : vector<8x192xf32>
    %83 = tpu.matmul %81, %82, %cst_12 {dimension_numbers = #tpu.dot_dimension_numbers<[1], [0], [0], [1], [0, 0, 1, 1], [], []>} : vector<8x64xf32>, vector<64x192xf32>, vector<8x192xf32> -> vector<8x192xf32>
    %c0_13 = arith.constant 0 : index
    %c0_14 = arith.constant 0 : index
    %84 = vector.load %arg6[%c0_13, %c0_14] : memref<1x192xf32, #tpu.memory_space<vmem>>, vector<1x192xf32>
    %85 = vector.broadcast %84 : vector<1x192xf32> to vector<8x192xf32>
    %86 = arith.addf %83, %85 : vector<8x192xf32>
    %87 = vector.extract_strided_slice %86 {offsets = [0, 0], sizes = [8, 64], strides = [1, 1]} : vector<8x192xf32> to vector<8x64xf32>
    %88 = vector.extract_strided_slice %86 {offsets = [0, 64], sizes = [8, 64], strides = [1, 1]} : vector<8x192xf32> to vector<8x64xf32>
    %89 = vector.extract_strided_slice %86 {offsets = [0, 128], sizes = [8, 64], strides = [1, 1]} : vector<8x192xf32> to vector<8x64xf32>
    %90 = vector.extract_strided_slice %88 {offsets = [0, 0], sizes = [8, 32], strides = [1, 1]} : vector<8x64xf32> to vector<8x32xf32>
    %91 = vector.extract_strided_slice %87 {offsets = [0, 0], sizes = [8, 32], strides = [1, 1]} : vector<8x64xf32> to vector<8x32xf32>
    %92 = vector.extract_strided_slice %89 {offsets = [0, 0], sizes = [8, 32], strides = [1, 1]} : vector<8x64xf32> to vector<8x32xf32>
    %cst_15 = arith.constant dense<0.000000e+00> : vector<8x8xf32>
    %93 = tpu.matmul %90, %91, %cst_15 {dimension_numbers = #tpu.dot_dimension_numbers<[1], [1], [0], [0], [0, 0, 1, 0], [], []>} : vector<8x32xf32>, vector<8x32xf32>, vector<8x8xf32> -> vector<8x8xf32>
    %cst_16 = arith.constant 0.176776692 : f32
    %94 = vector.broadcast %cst_16 : f32 to vector<8x8xf32>
    %95 = arith.mulf %93, %94 : vector<8x8xf32>
    %cst_17 = arith.constant dense<0xFF800000> : vector<8xf32>
    %96 = vector.multi_reduction <maximumf>, %95, %cst_17 [1] : vector<8x8xf32> to vector<8xf32>
    %97 = vector.shape_cast %96 : vector<8xf32> to vector<8x1xf32>
    %98 = vector.broadcast %97 : vector<8x1xf32> to vector<8x8xf32>
    %99 = arith.subf %95, %98 : vector<8x8xf32>
    %100 = math.exp %99 : vector<8x8xf32>
    %cst_18 = arith.constant dense<0.000000e+00> : vector<8xf32>
    %101 = vector.multi_reduction <add>, %100, %cst_18 [1] : vector<8x8xf32> to vector<8xf32>
    %102 = vector.shape_cast %101 : vector<8xf32> to vector<8x1xf32>
    %103 = tpu.reciprocal %102 {approx = true} : vector<8x1xf32> -> vector<8x1xf32>
    %104 = vector.broadcast %103 : vector<8x1xf32> to vector<8x8xf32>
    %105 = arith.mulf %100, %104 : vector<8x8xf32>
    %cst_19 = arith.constant dense<0.000000e+00> : vector<8x32xf32>
    %106 = tpu.matmul %105, %92, %cst_19 {dimension_numbers = #tpu.dot_dimension_numbers<[1], [0], [0], [1], [0, 0, 1, 1], [], []>} : vector<8x8xf32>, vector<8x32xf32>, vector<8x32xf32> -> vector<8x32xf32>
    %c0_20 = arith.constant 0 : index
    %c0_21 = arith.constant 0 : index
    %107 = vector.load %arg7[%c0_20, %c0_21] : memref<64x64xf32, #tpu.memory_space<vmem>>, vector<32x64xf32>
    %cst_22 = arith.constant dense<0.000000e+00> : vector<8x64xf32>
    %108 = tpu.matmul %106, %107, %cst_22 {dimension_numbers = #tpu.dot_dimension_numbers<[1], [0], [0], [1], [0, 0, 1, 1], [], []>} : vector<8x32xf32>, vector<32x64xf32>, vector<8x64xf32> -> vector<8x64xf32>
    %109 = vector.extract_strided_slice %88 {offsets = [0, 32], sizes = [8, 32], strides = [1, 1]} : vector<8x64xf32> to vector<8x32xf32>
    %110 = vector.extract_strided_slice %87 {offsets = [0, 32], sizes = [8, 32], strides = [1, 1]} : vector<8x64xf32> to vector<8x32xf32>
    %111 = vector.extract_strided_slice %89 {offsets = [0, 32], sizes = [8, 32], strides = [1, 1]} : vector<8x64xf32> to vector<8x32xf32>
    %cst_23 = arith.constant dense<0.000000e+00> : vector<8x8xf32>
    %112 = tpu.matmul %109, %110, %cst_23 {dimension_numbers = #tpu.dot_dimension_numbers<[1], [1], [0], [0], [0, 0, 1, 0], [], []>} : vector<8x32xf32>, vector<8x32xf32>, vector<8x8xf32> -> vector<8x8xf32>
    %cst_24 = arith.constant 0.176776692 : f32
    %113 = vector.broadcast %cst_24 : f32 to vector<8x8xf32>
    %114 = arith.mulf %112, %113 : vector<8x8xf32>
    %cst_25 = arith.constant dense<0xFF800000> : vector<8xf32>
    %115 = vector.multi_reduction <maximumf>, %114, %cst_25 [1] : vector<8x8xf32> to vector<8xf32>
    %116 = vector.shape_cast %115 : vector<8xf32> to vector<8x1xf32>
    %117 = vector.broadcast %116 : vector<8x1xf32> to vector<8x8xf32>
    %118 = arith.subf %114, %117 : vector<8x8xf32>
    %119 = math.exp %118 : vector<8x8xf32>
    %cst_26 = arith.constant dense<0.000000e+00> : vector<8xf32>
    %120 = vector.multi_reduction <add>, %119, %cst_26 [1] : vector<8x8xf32> to vector<8xf32>
    %121 = vector.shape_cast %120 : vector<8xf32> to vector<8x1xf32>
    %122 = tpu.reciprocal %121 {approx = true} : vector<8x1xf32> -> vector<8x1xf32>
    %123 = vector.broadcast %122 : vector<8x1xf32> to vector<8x8xf32>
    %124 = arith.mulf %119, %123 : vector<8x8xf32>
    %cst_27 = arith.constant dense<0.000000e+00> : vector<8x32xf32>
    %125 = tpu.matmul %124, %111, %cst_27 {dimension_numbers = #tpu.dot_dimension_numbers<[1], [0], [0], [1], [0, 0, 1, 1], [], []>} : vector<8x8xf32>, vector<8x32xf32>, vector<8x32xf32> -> vector<8x32xf32>
    %c32 = arith.constant 32 : index
    %c0_28 = arith.constant 0 : index
    %126 = vector.load %arg7[%c32, %c0_28] : memref<64x64xf32, #tpu.memory_space<vmem>>, vector<32x64xf32>
    %cst_29 = arith.constant dense<0.000000e+00> : vector<8x64xf32>
    %127 = tpu.matmul %125, %126, %cst_29 {dimension_numbers = #tpu.dot_dimension_numbers<[1], [0], [0], [1], [0, 0, 1, 1], [], []>} : vector<8x32xf32>, vector<32x64xf32>, vector<8x64xf32> -> vector<8x64xf32>
    %128 = arith.addf %108, %127 : vector<8x64xf32>
    %c0_30 = arith.constant 0 : index
    %c0_31 = arith.constant 0 : index
    %129 = vector.load %arg8[%c0_30, %c0_31] : memref<1x64xf32, #tpu.memory_space<vmem>>, vector<1x64xf32>
    %130 = vector.broadcast %129 : vector<1x64xf32> to vector<8x64xf32>
    %131 = arith.addf %128, %130 : vector<8x64xf32>
    %c0_32 = arith.constant 0 : index
    %c0_33 = arith.constant 0 : index
    %c0_34 = arith.constant 0 : index
    %132 = vector.load %arg9[%c0_32, %c0_33, %c0_34] : memref<1x8x64xf32, #tpu.memory_space<vmem>>, vector<1x8x64xf32>
    %133 = vector.shape_cast %132 : vector<1x8x64xf32> to vector<8x64xf32>
    %134 = vector.shape_cast %131 : vector<8x64xf32> to vector<1x8x64xf32>
    tpu.vector_store %arg9[%c0_32, %c0_33, %c0_34], %134 {strides = array<i32>} : memref<1x8x64xf32, #tpu.memory_space<vmem>>, vector<1x8x64xf32>,
    return
  }
  func.func @transform_0(%arg0: i32) -> (i32, i32, i32) {
    %c0_i32 = arith.constant 0 : i32
    %c0_i32_0 = arith.constant 0 : i32
    %c0_i32_1 = arith.constant 0 : i32
    return %arg0, %c0_i32, %c0_i32_0 : i32, i32, i32
  }
  func.func @transform_1(%arg0: i32) -> (i32, i32) {
    %c0_i32 = arith.constant 0 : i32
    %c0_i32_0 = arith.constant 0 : i32
    %c0_i32_1 = arith.constant 0 : i32
    return %c0_i32, %c0_i32_0 : i32, i32
  }
  func.func @transform_2(%arg0: i32) -> (i32, i32) {
    %c0_i32 = arith.constant 0 : i32
    %c0_i32_0 = arith.constant 0 : i32
    %c0_i32_1 = arith.constant 0 : i32
    return %c0_i32, %c0_i32_0 : i32, i32
  }
  func.func @transform_3(%arg0: i32) -> (i32, i32) {
    %c0_i32 = arith.constant 0 : i32
    %c0_i32_0 = arith.constant 0 : i32
    %c0_i32_1 = arith.constant 0 : i32
    return %c0_i32, %c0_i32_0 : i32, i32
  }
  func.func @transform_4(%arg0: i32) -> (i32, i32) {
    %c0_i32 = arith.constant 0 : i32
    %c0_i32_0 = arith.constant 0 : i32
    %c0_i32_1 = arith.constant 0 : i32
    return %c0_i32, %c0_i32_0 : i32, i32
  }
  func.func @transform_5(%arg0: i32) -> (i32, i32) {
    %c0_i32 = arith.constant 0 : i32
    %c0_i32_0 = arith.constant 0 : i32
    %c0_i32_1 = arith.constant 0 : i32
    return %c0_i32, %c0_i32_0 : i32, i32
  }
  func.func @transform_6(%arg0: i32) -> (i32, i32) {
    %c0_i32 = arith.constant 0 : i32
    %c0_i32_0 = arith.constant 0 : i32
    %c0_i32_1 = arith.constant 0 : i32
    return %c0_i32, %c0_i32_0 : i32, i32
  }
  func.func @transform_7(%arg0: i32) -> (i32, i32) {
    %c0_i32 = arith.constant 0 : i32
    %c0_i32_0 = arith.constant 0 : i32
    %c0_i32_1 = arith.constant 0 : i32
    return %c0_i32, %c0_i32_0 : i32, i32
  }
  func.func @transform_8(%arg0: i32) -> (i32, i32, i32) {
    %c0_i32 = arith.constant 0 : i32
    %c0_i32_0 = arith.constant 0 : i32
    %c0_i32_1 = arith.constant 0 : i32
    return %arg0, %c0_i32, %c0_i32_0 : i32, i32, i32
  }
}

</mosaic_0001>

<llo_original>
// kernel: cau_forward.1
$region0: #{cau_forward.1}
  #allocation0 [shape = 'u32[]', space=smem, size = 0x4, offset = 0x4, fixed_abs, tag = 'smem constant byte address 0x4 - core index']
  #allocation1 [shape = 'u32[144,128]{1,0:T(1,128)}', space=vmem, size = 0x12000, scoped, tag = 'internal scratch']
  #allocation2 [shape = 'f32[1,1]{1,0:T(1,128)S(1)}', space=vmem, size = 0x200, scoped, tag = 'scoped memory for cau_forward.1']
  %s0 = inlined_call_operand.vmem [shape: f32[2,8,64], index: 0, kind: input, shape index: {}]
  %s1 = inlined_call_operand.vmem [shape: f32[56,8], index: 1, kind: input, shape index: {}]
  %s2 = inlined_call_operand.vmem [shape: f32[1,64], index: 2, kind: input, shape index: {}]
  %s3 = inlined_call_operand.<no memory space> [shape: f32[1,1], index: 3, kind: input, shape index: {}]
  %s4 = inlined_call_operand.vmem [shape: f32[64,192], index: 4, kind: input, shape index: {}]
  %s5 = inlined_call_operand.vmem [shape: f32[1,192], index: 5, kind: input, shape index: {}]
  %s6 = inlined_call_operand.vmem [shape: f32[64,64], index: 6, kind: input, shape index: {}]
  %s7 = inlined_call_operand.vmem [shape: f32[1,64], index: 7, kind: input, shape index: {}]
  %s8 = inlined_call_operand.hbm [shape: f32[2,8,64], index: 8, kind: output, shape index: {}]
  %s9 = sld [smem:[#allocation0]]
  $region65: #{cau_forward.1} parent=0
    _
  %s11 = ssub.s32 1, %s9
  %s12 = scalar_select 0, %s11, %s9
  %v13 = vstv %s3
  %14 = vst [vmem:[#allocation2] sm:$0x1] %v13
  $region1: #{cau_forward.1} parent=0
    #allocation3 [shape = 'u8[8192]{0}', space=vmem, size = 0x2000, scoped, tag = 'output window, operand 0']
    #allocation4 [shape = 's32[2]{0}', space=sflag, size = 0x8, scoped, tag = 'scoped memory for cau_forward.1']
    %15 = vsyncpa [#allocation4], 0
    %s16 = scalar_lea.sflag [#allocation4], 1
    %17 = vsyncpa %s16, 0
    loop: start=0, step=1, limit=4
    $region2: #{cau_forward.1} parent=1 // loop_pre_header
      _
    $region3: #{cau_forward.1} parent=1 // loop_header
      %s19 = sphi 0, %s23
      %p20 = scmp.ge.s32.totalorder %s19, 4
      %s29 = sphi 0, %s31
      %s32 = sphi 0, %s29
      %s33 = sphi 0, %s32
      %s49 = sphi 0, %s33
      %s53 = sphi 0, %s53
      %s55 = sphi 0, %s53
      %s56 = sphi 0, %s55
      %s70 = sphi 0, %s56
      %s74 = sphi 0, %s74
      %s76 = sphi 0, %s74
      %s77 = sphi 0, %s76
      %s91 = sphi 0, %s77
      %s95 = sphi 0, %s95
      %s97 = sphi 0, %s95
      %s98 = sphi 0, %s97
      %s112 = sphi 0, %s98
      %s116 = sphi 0, %s116
      %s118 = sphi 0, %s116
      %s119 = sphi 0, %s118
      %s133 = sphi 0, %s119
      %s137 = sphi 0, %s137
      %s139 = sphi 0, %s137
      %s140 = sphi 0, %s139
      %s154 = sphi 0, %s140
      %s158 = sphi 0, %s158
      %s160 = sphi 0, %s158
      %s161 = sphi 0, %s160
      %s175 = sphi 0, %s161
      %s179 = sphi 0, %s179
      %s181 = sphi 0, %s179
      %s182 = sphi 0, %s181
      %s196 = sphi 0, %s182
      %s202 = sphi 0, %s204
      %s205 = sphi 0, %s202
      %s206 = sphi 0, %s205
      %s222 = sphi 0, %s206
    $region4: #{cau_forward.1} parent=1 // loop_header_branch
      %22 = sbr.rel (%p20) target = $region8
    $region5: #{cau_forward.1} parent=1 // loop_body
      %s24 = ssub.s32 %s19, 1
      %s25 = ssub.s32 %s19, 2
      %s26 = sadd.s32 %s19, 1
      %s27 = ssub.s32 %s19, %s26
      %p28 = scmp.eq.s32.totalorder %s27, 0
      %s30 = sadd.s32 %s29, 1
      %s31 = scalar_select %p28, %s29, %s30
      %p34 = pneg %p28
      %p35 = scmp.eq.s32.totalorder %s19, 1
      %p36 = por %p34, %p35
      %p37 = scmp.ne.s32.totalorder %s29, %s32
      %p38 = scmp.eq.s32.totalorder %s19, 0
      %p39 = por %p37, %p38
      %p40 = scmp.ne.s32.totalorder %s29, %s32
      %p41 = scmp.eq.s32.totalorder %s24, 1
      %p42 = por %p40, %p41
      %p43 = scmp.ne.s32.totalorder %s32, %s33
      %p44 = scmp.eq.s32.totalorder %s24, 0
      %p45 = por %p43, %p44
      %p46 = scmp.ne.s32.totalorder %s32, %s33
      %p47 = scmp.eq.s32.totalorder %s25, 1
      %p48 = por %p46, %p47
      %p50 = scmp.ne.s32.totalorder %s33, %s49
      %p51 = scmp.eq.s32.totalorder %s25, 0
      %p52 = por %p50, %p51
      %s54 = sadd.s32 %s53, 1
      %p57 = scmp.eq.s32.totalorder %s19, 1
      %p58 = scmp.ne.s32.totalorder %s53, %s55
      %p59 = scmp.eq.s32.totalorder %s19, 0
      %p60 = por %p58, %p59
      %p61 = scmp.ne.s32.totalorder %s53, %s55
      %p62 = scmp.eq.s32.totalorder %s24, 1
      %p63 = por %p61, %p62
      %p64 = scmp.ne.s32.totalorder %s55, %s56
      %p65 = scmp.eq.s32.totalorder %s24, 0
      %p66 = por %p64, %p65
      %p67 = scmp.ne.s32.totalorder %s55, %s56
      %p68 = scmp.eq.s32.totalorder %s25, 1
      %p69 = por %p67, %p68
      %p71 = scmp.ne.s32.totalorder %s56, %s70
      %p72 = scmp.eq.s32.totalorder %s25, 0
      %p73 = por %p71, %p72
      %s75 = sadd.s32 %s74, 1
      %p78 = scmp.eq.s32.totalorder %s19, 1
      %p79 = scmp.ne.s32.totalorder %s74, %s76
      %p80 = scmp.eq.s32.totalorder %s19, 0
      %p81 = por %p79, %p80
      %p82 = scmp.ne.s32.totalorder %s74, %s76
      %p83 = scmp.eq.s32.totalorder %s24, 1
      %p84 = por %p82, %p83
      %p85 = scmp.ne.s32.totalorder %s76, %s77
      %p86 = scmp.eq.s32.totalorder %s24, 0
      %p87 = por %p85, %p86
      %p88 = scmp.ne.s32.totalorder %s76, %s77
      %p89 = scmp.eq.s32.totalorder %s25, 1
      %p90 = por %p88, %p89
      %p92 = scmp.ne.s32.totalorder %s77, %s91
      %p93 = scmp.eq.s32.totalorder %s25, 0
      %p94 = por %p92, %p93
      %s96 = sadd.s32 %s95, 1
      %p99 = scmp.eq.s32.totalorder %s19, 1
      %p100 = scmp.ne.s32.totalorder %s95, %s97
      %p101 = scmp.eq.s32.totalorder %s19, 0
      %p102 = por %p100, %p101
      %p103 = scmp.ne.s32.totalorder %s95, %s97
      %p104 = scmp.eq.s32.totalorder %s24, 1
      %p105 = por %p103, %p104
      %p106 = scmp.ne.s32.totalorder %s97, %s98
      %p107 = scmp.eq.s32.totalorder %s24, 0
      %p108 = por %p106, %p107
      %p109 = scmp.ne.s32.totalorder %s97, %s98
      %p110 = scmp.eq.s32.totalorder %s25, 1
      %p111 = por %p109, %p110
      %p113 = scmp.ne.s32.totalorder %s98, %s112
      %p114 = scmp.eq.s32.totalorder %s25, 0
      %p115 = por %p113, %p114
      %s117 = sadd.s32 %s116, 1
      %p120 = scmp.eq.s32.totalorder %s19, 1
      %p121 = scmp.ne.s32.totalorder %s116, %s118
      %p122 = scmp.eq.s32.totalorder %s19, 0
      %p123 = por %p121, %p122
      %p124 = scmp.ne.s32.totalorder %s116, %s118
      %p125 = scmp.eq.s32.totalorder %s24, 1
      %p126 = por %p124, %p125
      %p127 = scmp.ne.s32.totalorder %s118, %s119
      %p128 = scmp.eq.s32.totalorder %s24, 0
      %p129 = por %p127, %p128
      %p130 = scmp.ne.s32.totalorder %s118, %s119
      %p131 = scmp.eq.s32.totalorder %s25, 1
      %p132 = por %p130, %p131
      %p134 = scmp.ne.s32.totalorder %s119, %s133
      %p135 = scmp.eq.s32.totalorder %s25, 0
      %p136 = por %p134, %p135
      %s138 = sadd.s32 %s137, 1
      %p141 = scmp.eq.s32.totalorder %s19, 1
      %p142 = scmp.ne.s32.totalorder %s137, %s139
      %p143 = scmp.eq.s32.totalorder %s19, 0
      %p144 = por %p142, %p143
      %p145 = scmp.ne.s32.totalorder %s137, %s139
      %p146 = scmp.eq.s32.totalorder %s24, 1
      %p147 = por %p145, %p146
      %p148 = scmp.ne.s32.totalorder %s139, %s140
      %p149 = scmp.eq.s32.totalorder %s24, 0
      %p150 = por %p148, %p149
      %p151 = scmp.ne.s32.totalorder %s139, %s140
      %p152 = scmp.eq.s32.totalorder %s25, 1
      %p153 = por %p151, %p152
      %p155 = scmp.ne.s32.totalorder %s140, %s154
      %p156 = scmp.eq.s32.totalorder %s25, 0
      %p157 = por %p155, %p156
      %s159 = sadd.s32 %s158, 1
      %p162 = scmp.eq.s32.totalorder %s19, 1
      %p163 = scmp.ne.s32.totalorder %s158, %s160
      %p164 = scmp.eq.s32.totalorder %s19, 0
      %p165 = por %p163, %p164
      %p166 = scmp.ne.s32.totalorder %s158, %s160
      %p167 = scmp.eq.s32.totalorder %s24, 1
      %p168 = por %p166, %p167
      %p169 = scmp.ne.s32.totalorder %s160, %s161
      %p170 = scmp.eq.s32.totalorder %s24, 0
      %p171 = por %p169, %p170
      %p172 = scmp.ne.s32.totalorder %s160, %s161
      %p173 = scmp.eq.s32.totalorder %s25, 1
      %p174 = por %p172, %p173
      %p176 = scmp.ne.s32.totalorder %s161, %s175
      %p177 = scmp.eq.s32.totalorder %s25, 0
      %p178 = por %p176, %p177
      %s180 = sadd.s32 %s179, 1
      %p183 = scmp.eq.s32.totalorder %s19, 1
      %p184 = scmp.ne.s32.totalorder %s179, %s181
      %p185 = scmp.eq.s32.totalorder %s19, 0
      %p186 = por %p184, %p185
      %p187 = scmp.ne.s32.totalorder %s179, %s181
      %p188 = scmp.eq.s32.totalorder %s24, 1
      %p189 = por %p187, %p188
      %p190 = scmp.ne.s32.totalorder %s181, %s182
      %p191 = scmp.eq.s32.totalorder %s24, 0
      %p192 = por %p190, %p191
      %p193 = scmp.ne.s32.totalorder %s181, %s182
      %p194 = scmp.eq.s32.totalorder %s25, 1
      %p195 = por %p193, %p194
      %p197 = scmp.ne.s32.totalorder %s182, %s196
      %p198 = scmp.eq.s32.totalorder %s25, 0
      %p199 = por %p197, %p198
      %s200 = ssub.s32 %s19, %s26
      %p201 = scmp.eq.s32.totalorder %s200, 0
      %s203 = sadd.s32 %s202, 1
      %s204 = scalar_select %p201, %s202, %s203
      %p207 = pneg %p201
      %p208 = scmp.eq.s32.totalorder %s19, 1
      %p209 = por %p207, %p208
      %p210 = scmp.ne.s32.totalorder %s202, %s205
      %p211 = scmp.eq.s32.totalorder %s19, 0
      %p212 = por %p210, %p211
      %p213 = scmp.ne.s32.totalorder %s202, %s205
      %p214 = scmp.eq.s32.totalorder %s24, 1
      %p215 = por %p213, %p214
      %p216 = scmp.ne.s32.totalorder %s205, %s206
      %p217 = scmp.eq.s32.totalorder %s24, 0
      %p218 = por %p216, %p217
      %p219 = scmp.ne.s32.totalorder %s205, %s206
      %p220 = scmp.eq.s32.totalorder %s25, 1
      %p221 = por %p219, %p220
      %p223 = scmp.ne.s32.totalorder %s206, %s222
      %p224 = scmp.eq.s32.totalorder %s25, 0
      %p225 = por %p223, %p224
      %p226 = scmp.le.s32.totalorder 1, %s19
      %p227 = scmp.lt.s32.totalorder %s19, 3
      %p228 = pnand %p226, %p227
      %p229 = pneg %p228
      // Predicated region
      $region9: #{cau_forward.1} parent=5 // pred_check
        _
      $region10: #{cau_forward.1} parent=5 // pred_check_branch
        %231 = sbr.rel (%p228) target = $region12
      $region11: #{cau_forward.1} parent=5 // pred_region
        %s232 = ssub.s32 %s19, 1
        // Predicated region
        $region13: #{cau_forward.1} parent=11 // pred_check
          %p233 = pneg %p66
        $region14: #{cau_forward.1} parent=11 // pred_check_branch
          %235 = sbr.rel (%p233) target = $region16
        $region15: #{cau_forward.1} parent=11 // pred_region
          _
        $region16: #{cau_forward.1} parent=11 // pred_fallthru
          _
        // Predicated region
        $region17: #{cau_forward.1} parent=11 // pred_check
          %p236 = pneg %p87
        $region18: #{cau_forward.1} parent=11 // pred_check_branch
          %238 = sbr.rel (%p236) target = $region20
        $region19: #{cau_forward.1} parent=11 // pred_region
          _
        $region20: #{cau_forward.1} parent=11 // pred_fallthru
          _
        // Predicated region
        $region21: #{cau_forward.1} parent=11 // pred_check
          %p239 = pneg %p108
        $region22: #{cau_forward.1} parent=11 // pred_check_branch
          %241 = sbr.rel (%p239) target = $region24
        $region23: #{cau_forward.1} parent=11 // pred_region
          _
        $region24: #{cau_forward.1} parent=11 // pred_fallthru
          _
        // Predicated region
        $region25: #{cau_forward.1} parent=11 // pred_check
          %p242 = pneg %p129
        $region26: #{cau_forward.1} parent=11 // pred_check_branch
          %244 = sbr.rel (%p242) target = $region28
        $region27: #{cau_forward.1} parent=11 // pred_region
          _
        $region28: #{cau_forward.1} parent=11 // pred_fallthru
          _
        // Predicated region
        $region29: #{cau_forward.1} parent=11 // pred_check
          %p245 = pneg %p150
        $region30: #{cau_forward.1} parent=11 // pred_check_branch
          %247 = sbr.rel (%p245) target = $region32
        $region31: #{cau_forward.1} parent=11 // pred_region
          _
        $region32: #{cau_forward.1} parent=11 // pred_fallthru
          _
        // Predicated region
        $region33: #{cau_forward.1} parent=11 // pred_check
          %p248 = pneg %p171
        $region34: #{cau_forward.1} parent=11 // pred_check_branch
          %250 = sbr.rel (%p248) target = $region36
        $region35: #{cau_forward.1} parent=11 // pred_region
          _
        $region36: #{cau_forward.1} parent=11 // pred_fallthru
          _
        // Predicated region
        $region37: #{cau_forward.1} parent=11 // pred_check
          %p251 = pneg %p192
        $region38: #{cau_forward.1} parent=11 // pred_check_branch
          %253 = sbr.rel (%p251) target = $region40
        $region39: #{cau_forward.1} parent=11 // pred_region
          _
        $region40: #{cau_forward.1} parent=11 // pred_fallthru
          _
      $region12: #{cau_forward.1} parent=5 // pred_fallthru
        _
      %p254 = scmp.lt.s32.totalorder %s19, 2
      // Predicated region
      $region41: #{cau_forward.1} parent=5 // pred_check
        %p255 = pneg %p254
      $region42: #{cau_forward.1} parent=5 // pred_check_branch
        %257 = sbr.rel (%p255) target = $region44
      $region43: #{cau_forward.1} parent=5 // pred_region
        // Predicated region
        $region45: #{cau_forward.1} parent=43 // pred_check
          %p258 = pneg %p39
        $region46: #{cau_forward.1} parent=43 // pred_check_branch
          %260 = sbr.rel (%p258) target = $region48
        $region47: #{cau_forward.1} parent=43 // pred_region
          %p261 = scmp.lt.s32.totalorder %s19, 1
          %s262 = scalar_select %p261, %s19, 1
          %s263 = smul.addr %s262, 8
          %s264 = scalar_lea.vmem %s0, %s263
        $region48: #{cau_forward.1} parent=43 // pred_fallthru
          _
      $region44: #{cau_forward.1} parent=5 // pred_fallthru
        _
      %p265 = scmp.le.s32.totalorder 1, %s19
      %p266 = scmp.lt.s32.totalorder %s19, 3
      %p267 = pnand %p265, %p266
      %p268 = pneg %p267
      // Predicated region
      $region49: #{cau_forward.1} parent=5 // pred_check
        _
      $region50: #{cau_forward.1} parent=5 // pred_check_branch
        %270 = sbr.rel (%p267) target = $region52
      $region51: #{cau_forward.1} parent=5 // pred_region
        %s271 = ssub.s32 %s19, 1
        %p272 = scmp.lt.s32.totalorder %s24, 1
        %s273 = scalar_select %p272, %s24, 1
        %s274 = smul.addr %s273, 8
        %s275 = scalar_lea.vmem %s0, %s274
        %p276 = pneg %p45
        %p277 = pneg %p42
        %p278 = pneg %p66
        %p279 = pneg %p63
        %p280 = pneg %p87
        %p281 = pneg %p84
        %p282 = pneg %p108
        %p283 = pneg %p105
        %p284 = pneg %p129
        %p285 = pneg %p126
        %p286 = pneg %p150
        %p287 = pneg %p147
        %p288 = pneg %p171
        %p289 = pneg %p168
        %p290 = pneg %p192
        %p291 = pneg %p189
        %p292 = pneg %p218
        %p293 = pneg %p215
        %s294 = sand.u32 %s205, 1
        %s295 = scalar_lea.sflag [#allocation4], %s294
        %s296 = sand.u32 %s205, 1
        %s297 = smul.addr %s296, 8
        %s298 = scalar_lea.vmem [#allocation3], %s297
        %p299 = scmp.lt.s32.totalorder %s24, 1
        %s300 = scalar_select %p299, %s24, 1
        %s301 = smul.addr %s300, 8
        %s302 = scalar_lea.vmem %s0, %s301
        %v303 = vld [vmem:[%s302] sm:$0xff]
        %v304 = vld [vmem:[%s1] sm:$0xff]
        %v305 = vld [vmem:[%s1 + $0x8] sm:$0xff]
        %v306 = vld [vmem:[%s1 + $0x10] sm:$0xff]
        %v307 = vld [vmem:[%s1 + $0x18] sm:$0xff]
        %v308 = vld [vmem:[%s1 + $0x20] sm:$0xff]
        %v309 = vld [vmem:[%s1 + $0x28] sm:$0xff]
        %v310 = vld [vmem:[%s1 + $0x30] sm:$0xff]
        %vm311 = vcmask 64512
        %v313 = vsel %vm311, %v304, 0
        %v316 = vsel %vm311, %v305, 0
        %v319 = vsel %vm311, %v306, 0
        %v322 = vsel %vm311, %v307, 0
        %v325 = vsel %vm311, %v308, 0
        %v328 = vsel %vm311, %v309, 0
        %v331 = vsel %vm311, %v310, 0
        %333 = vmatprep.subr.mxu0 0.0
        %334 = vmatpush1.msra.mxu0 %v303
        %335 = vmatprep.subr.mxu0 0.0
        %336 = vmatpush1.msra.mxu0 0.0
        %337 = vmatprep.subr.mxu0 0.0
        %338 = vmatpush1.msra.mxu0 0.0
        %339 = vmatprep.subr.mxu0 0.0
        %340 = vmatpush1.msra.mxu0 0.0
        %341 = vmatprep.subr.mxu0 0.0
        %342 = vmatpush1.msra.mxu0 0.0
        %343 = vmatprep.subr.mxu0 0.0
        %344 = vmatpush1.msra.mxu0 0.0
        %345 = vmatprep.subr.mxu0 0.0
        %346 = vmatpush1.msra.mxu0 0.0
        %347 = vmatprep.subr.mxu0 0.0
        %348 = vmatpush1.msra.mxu0 0.0
        %349 = vmatprep.subr.mxu0 0.0
        %350 = vmatpush1.msra.mxu0 0.0
        %351 = vmatprep.subr.mxu0 0.0
        %352 = vmatpush1.msra.mxu0 0.0
        %353 = vmatprep.subr.mxu0 0.0
        %354 = vmatpush1.msra.mxu0 0.0
        %355 = vmatprep.subr.mxu0 0.0
        %356 = vmatpush1.msra.mxu0 0.0
        %357 = vmatprep.subr.mxu0 0.0
        %358 = vmatpush1.msra.mxu0 0.0
        %359 = vmatprep.subr.mxu0 0.0
        %360 = vmatpush1.msra.mxu0 0.0
        %361 = vmatprep.subr.mxu0 0.0
        %362 = vmatpush1.msra.mxu0 0.0
        %363 = vmatprep.subr.mxu0 0.0
        %364 = vmatpush1.msra.mxu0 0.0
        %365 = vmatprep.subr.mxu0 0.0
        %366 = vmatpush1.msra.mxu0 0.0
        %367 = vmatprep.subr.mxu0 0.0
        %368 = vmatpush1.msra.mxu0 0.0
        %369 = vmatprep.subr.mxu0 0.0
        %370 = vmatpush1.msra.mxu0 0.0
        %371 = vmatprep.subr.mxu0 0.0
        %372 = vmatpush1.msra.mxu0 0.0
        %373 = vmatprep.subr.mxu0 0.0
        %374 = vmatpush1.msra.mxu0 0.0
        %375 = vmatprep.subr.mxu0 0.0
        %376 = vmatpush1.msra.mxu0 0.0
        %377 = vmatprep.subr.mxu0 0.0
        %378 = vmatpush1.msra.mxu0 0.0
        %379 = vmatprep.subr.mxu0 0.0
        %380 = vmatpush1.msra.mxu0 0.0
        %381 = vmatprep.subr.mxu0 0.0
        %382 = vmatpush1.msra.mxu0 0.0
        %383 = vmatprep.subr.mxu0 0.0
        %384 = vmatpush1.msra.mxu0 0.0
        %385 = vmatprep.subr.mxu0 0.0
        %386 = vmatpush1.msra.mxu0 0.0
        %387 = vmatprep.subr.mxu0 0.0
        %388 = vmatpush1.msra.mxu0 0.0
        %389 = vmatprep.subr.mxu0 0.0
        %390 = vmatpush1.msra.mxu0 0.0
        %391 = vmatprep.subr.mxu0 0.0
        %392 = vmatpush1.msra.mxu0 0.0
        %393 = vmatprep.subr.mxu0 0.0
        %394 = vmatpush1.msra.mxu0 0.0
        %395 = vmatprep.subr.mxu0 0.0
        %396 = vmatpush1.msra.mxu0 0.0
        %397 = vmatprep.mubr.f32.mxu0 0.0
        %398 = vmatmul.mubr.f32.gmra.mrb[0].mxu0 %v313
        %v399 = vpop.f32.mrb[0].mxu0
        %v400 = vadd.f32 0.0, %v399
        %v401 = vpop.f32.mrb[0].mxu0
        %402 = vmatprep.mubr.f32.mxu0 0.0
        %403 = vmatmul.mubr.f32.gmra.mrb[0].mxu0 %v316
        %v404 = vpop.f32.mrb[0].mxu0
        %v405 = vadd.f32 0.0, %v404
        %v406 = vpop.f32.mrb[0].mxu0
        %407 = vmatprep.mubr.f32.mxu0 0.0
        %408 = vmatmul.mubr.f32.gmra.mrb[0].mxu0 %v319
        %v409 = vpop.f32.mrb[0].mxu0
        %v410 = vadd.f32 0.0, %v409
        %v411 = vpop.f32.mrb[0].mxu0
        %412 = vmatprep.mubr.f32.mxu0 0.0
        %413 = vmatmul.mubr.f32.gmra.mrb[0].mxu0 %v322
        %v414 = vpop.f32.mrb[0].mxu0
        %v415 = vadd.f32 0.0, %v414
        %v416 = vpop.f32.mrb[0].mxu0
        %417 = vmatprep.mubr.f32.mxu0 0.0
        %418 = vmatmul.mubr.f32.gmra.mrb[0].mxu0 %v325
        %v419 = vpop.f32.mrb[0].mxu0
        %v420 = vadd.f32 0.0, %v419
        %v421 = vpop.f32.mrb[0].mxu0
        %422 = vmatprep.mubr.f32.mxu0 0.0
        %423 = vmatmul.mubr.f32.gmra.mrb[0].mxu0 %v328
        %v424 = vpop.f32.mrb[0].mxu0
        %v425 = vadd.f32 0.0, %v424
        %v426 = vpop.f32.mrb[0].mxu0
        %427 = vmatprep.mubr.f32.mxu0 0.0
        %428 = vmatmul.mubr.f32.gmra.mrb[0].mxu0 %v331
        %v429 = vpop.f32.mrb[0].mxu0
        %v430 = vadd.f32 0.0, %v429
        %v431 = vpop.f32.mrb[0].mxu0
        %432 = vdwg.mxu0
        %v433 = vmax.f32 %v400, 0.0
        %v434 = vmax.f32 %v405, 0.0
        %v435 = vmax.f32 %v410, 0.0
        %v436 = vmax.f32 %v415, 0.0
        %v437 = vmax.f32 %v420, 0.0
        %v438 = vmax.f32 %v425, 0.0
        %v439 = vmax.f32 %v430, 0.0
        %v440 = vld [vmem:[%s2] sm:$0x1]
        %v442 = vlaneseq
        %v443 = vshrl.u32 %v442, 7
        %v444 = vsub.s32 0, %v443
        %v445 = vrot.slane %v440, %v444
        %v447 = vmul.f32 %v433, %v445
        %v448 = vmul.f32 %v434, %v445
        %v449 = vmul.f32 %v435, %v445
        %v450 = vmul.f32 %v436, %v445
        %v451 = vmul.f32 %v437, %v445
        %v452 = vmul.f32 %v438, %v445
        %v453 = vmul.f32 %v439, %v445
        %vm454 = vcmask 523264
        %v455 = vsel %vm454, %v447, 0.0
        %456 = vadd.xlane.f32.xlu0 %v455
        %v457 = vpop.xlane.xlu0 %456
        %v458 = vsel %vm454, %v448, 0.0
        %459 = vadd.xlane.f32.xlu0 %v458
        %v460 = vpop.xlane.xlu0 %459
        %v461 = vsel %vm454, %v449, 0.0
        %462 = vadd.xlane.f32.xlu0 %v461
        %v463 = vpop.xlane.xlu0 %462
        %v464 = vsel %vm454, %v450, 0.0
        %465 = vadd.xlane.f32.xlu0 %v464
        %v466 = vpop.xlane.xlu0 %465
        %v467 = vsel %vm454, %v451, 0.0
        %468 = vadd.xlane.f32.xlu0 %v467
        %v469 = vpop.xlane.xlu0 %468
        %v470 = vsel %vm454, %v452, 0.0
        %471 = vadd.xlane.f32.xlu0 %v470
        %v472 = vpop.xlane.xlu0 %471
        %v473 = vsel %vm454, %v453, 0.0
        %474 = vadd.xlane.f32.xlu0 %v473
        %v475 = vpop.xlane.xlu0 %474
        %v476 = vld [vmem:[#allocation2] sm:$0x1]
        %v478 = vlaneseq
        %v479 = vshrl.u32 %v478, 7
        %v480 = vsub.s32 0, %v479
        %v481 = vrot.slane %v476, %v480
        %v483 = vadd.f32 %v457, %v481
        %v484 = vadd.f32 %v460, %v481
        %v485 = vadd.f32 %v463, %v481
        %v486 = vadd.f32 %v466, %v481
        %v487 = vadd.f32 %v469, %v481
        %v488 = vadd.f32 %v472, %v481
        %v489 = vadd.f32 %v475, %v481
        %v490 = vmax.f32 %v483, %v484
        %v491 = vmax.f32 %v490, %v485
        %v492 = vmax.f32 %v491, %v486
        %v493 = vmax.f32 %v492, %v487
        %v494 = vmax.f32 %v493, %v488
        %v495 = vmax.f32 %v494, %v489
        %v496 = vsub.f32 %v483, %v495
        %v497 = vmul.f32 %v496, 1.442695
        %v498 = vpow.pop %v497
        %v499 = vsub.f32 %v484, %v495
        %v500 = vmul.f32 %v499, 1.442695
        %v501 = vpow.pop %v500
        %v502 = vsub.f32 %v485, %v495
        %v503 = vmul.f32 %v502, 1.442695
        %v504 = vpow.pop %v503
        %v505 = vsub.f32 %v486, %v495
        %v506 = vmul.f32 %v505, 1.442695
        %v507 = vpow.pop %v506
        %v508 = vsub.f32 %v487, %v495
        %v509 = vmul.f32 %v508, 1.442695
        %v510 = vpow.pop %v509
        %v511 = vsub.f32 %v488, %v495
        %v512 = vmul.f32 %v511, 1.442695
        %v513 = vpow.pop %v512
        %v514 = vsub.f32 %v489, %v495
        %v515 = vmul.f32 %v514, 1.442695
        %v516 = vpow.pop %v515
        %v517 = vadd.f32 %v498, %v501
        %v518 = vadd.f32 %v517, %v504
        %v519 = vadd.f32 %v518, %v507
        %v520 = vadd.f32 %v519, %v510
        %v521 = vadd.f32 %v520, %v513
        %v522 = vadd.f32 %v521, %v516
        %v523 = vrcp.pop %v522
        %v524 = vmul.f32 %v498, %v523
        %526 = vset.pattern.permute.xlu0 0
        %527 = vperm.xlu0 %526, %v524
        %v528 = vpop.permute.xlu0 %527
        %v530 = vmul.f32 %v528, %v433
        %v531 = vmul.f32 %v501, %v523
        %533 = vset.pattern.permute.xlu0 0
        %534 = vperm.xlu0 %533, %v531
        %v535 = vpop.permute.xlu0 %534
        %v537 = vmul.f32 %v535, %v434
        %v538 = vadd.f32 %v530, %v537
        %v539 = vmul.f32 %v504, %v523
        %541 = vset.pattern.permute.xlu0 0
        %542 = vperm.xlu0 %541, %v539
        %v543 = vpop.permute.xlu0 %542
        %v545 = vmul.f32 %v543, %v435
        %v546 = vadd.f32 %v538, %v545
        %v547 = vmul.f32 %v507, %v523
        %549 = vset.pattern.permute.xlu0 0
        %550 = vperm.xlu0 %549, %v547
        %v551 = vpop.permute.xlu0 %550
        %v553 = vmul.f32 %v551, %v436
        %v554 = vadd.f32 %v546, %v553
        %v555 = vmul.f32 %v510, %v523
        %557 = vset.pattern.permute.xlu0 0
        %558 = vperm.xlu0 %557, %v555
        %v559 = vpop.permute.xlu0 %558
        %v561 = vmul.f32 %v559, %v437
        %v562 = vadd.f32 %v554, %v561
        %v563 = vmul.f32 %v513, %v523
        %565 = vset.pattern.permute.xlu0 0
        %566 = vperm.xlu0 %565, %v563
        %v567 = vpop.permute.xlu0 %566
        %v569 = vmul.f32 %v567, %v438
        %v570 = vadd.f32 %v562, %v569
        %v571 = vmul.f32 %v516, %v523
        %573 = vset.pattern.permute.xlu0 0
        %574 = vperm.xlu0 %573, %v571
        %v575 = vpop.permute.xlu0 %574
        %v577 = vmul.f32 %v575, %v439
        %v578 = vadd.f32 %v570, %v577
        %v579 = vld [vmem:[%s4] sm:$0xff]
        %v580 = vld [vmem:[%s4 + $0x8] sm:$0xff]
        %v581 = vld [vmem:[%s4 + $0x10] sm:$0xff]
        %v582 = vld [vmem:[%s4 + $0x18] sm:$0xff]
        %v583 = vld [vmem:[%s4 + $0x20] sm:$0xff]
        %v584 = vld [vmem:[%s4 + $0x28] sm:$0xff]
        %v585 = vld [vmem:[%s4 + $0x30] sm:$0xff]
        %v586 = vld [vmem:[%s4 + $0x38] sm:$0xff]
        %v587 = vld [vmem:[%s4 + $0x40] sm:$0xff]
        %v588 = vld [vmem:[%s4 + $0x48] sm:$0xff]
        %v589 = vld [vmem:[%s4 + $0x50] sm:$0xff]
        %v590 = vld [vmem:[%s4 + $0x58] sm:$0xff]
        %v591 = vld [vmem:[%s4 + $0x60] sm:$0xff]
        %v592 = vld [vmem:[%s4 + $0x68] sm:$0xff]
        %v593 = vld [vmem:[%s4 + $0x70] sm:$0xff]
        %v594 = vld [vmem:[%s4 + $0x78] sm:$0xff]
        %v595 = vld [vmem:[%s5] sm:$0x3]
        %v597 = vlaneseq
        %v598 = vshrl.u32 %v597, 7
        %v599 = vsub.s32 0, %v598
        %v600 = vrot.slane %v595, %v599
        %v601 = vlaneseq
        %v602 = vshrl.u32 %v601, 7
        %v603 = vsub.s32 1, %v602
        %v604 = vrot.slane %v595, %v603
        %v608 = vsel %vm454, %v578, 0
        %610 = vmatprep.subr.mxu0 %v580
        %611 = vmatpush1.msra.mxu0 %v579
        %612 = vmatprep.subr.mxu0 %v582
        %613 = vmatpush1.msra.mxu0 %v581
        %614 = vmatprep.subr.mxu0 %v584
        %615 = vmatpush1.msra.mxu0 %v583
        %616 = vmatprep.subr.mxu0 %v586
        %617 = vmatpush1.msra.mxu0 %v585
        %618 = vmatprep.subr.mxu0 %v588
        %619 = vmatpush1.msra.mxu0 %v587
        %620 = vmatprep.subr.mxu0 %v590
        %621 = vmatpush1.msra.mxu0 %v589
        %622 = vmatprep.subr.mxu0 %v592
        %623 = vmatpush1.msra.mxu0 %v591
        %624 = vmatprep.subr.mxu0 %v594
        %625 = vmatpush1.msra.mxu0 %v593
        %626 = vmatprep.subr.mxu0 0.0
        %627 = vmatpush1.msra.mxu0 0.0
        %628 = vmatprep.subr.mxu0 0.0
        %629 = vmatpush1.msra.mxu0 0.0
        %630 = vmatprep.subr.mxu0 0.0
        %631 = vmatpush1.msra.mxu0 0.0
        %632 = vmatprep.subr.mxu0 0.0
        %633 = vmatpush1.msra.mxu0 0.0
        %634 = vmatprep.subr.mxu0 0.0
        %635 = vmatpush1.msra.mxu0 0.0
        %636 = vmatprep.subr.mxu0 0.0
        %637 = vmatpush1.msra.mxu0 0.0
        %638 = vmatprep.subr.mxu0 0.0
        %639 = vmatpush1.msra.mxu0 0.0
        %640 = vmatprep.subr.mxu0 0.0
        %641 = vmatpush1.msra.mxu0 0.0
        %642 = vmatprep.subr.mxu0 0.0
        %643 = vmatpush1.msra.mxu0 0.0
        %644 = vmatprep.subr.mxu0 0.0
        %645 = vmatpush1.msra.mxu0 0.0
        %646 = vmatprep.subr.mxu0 0.0
        %647 = vmatpush1.msra.mxu0 0.0
        %648 = vmatprep.subr.mxu0 0.0
        %649 = vmatpush1.msra.mxu0 0.0
        %650 = vmatprep.subr.mxu0 0.0
        %651 = vmatpush1.msra.mxu0 0.0
        %652 = vmatprep.subr.mxu0 0.0
        %653 = vmatpush1.msra.mxu0 0.0
        %654 = vmatprep.subr.mxu0 0.0
        %655 = vmatpush1.msra.mxu0 0.0
        %656 = vmatprep.subr.mxu0 0.0
        %657 = vmatpush1.msra.mxu0 0.0
        %658 = vmatprep.subr.mxu0 0.0
        %659 = vmatpush1.msra.mxu0 0.0
        %660 = vmatprep.subr.mxu0 0.0
        %661 = vmatpush1.msra.mxu0 0.0
        %662 = vmatprep.subr.mxu0 0.0
        %663 = vmatpush1.msra.mxu0 0.0
        %664 = vmatprep.subr.mxu0 0.0
        %665 = vmatpush1.msra.mxu0 0.0
        %666 = vmatprep.subr.mxu0 0.0
        %667 = vmatpush1.msra.mxu0 0.0
        %668 = vmatprep.subr.mxu0 0.0
        %669 = vmatpush1.msra.mxu0 0.0
        %670 = vmatprep.subr.mxu0 0.0
        %671 = vmatpush1.msra.mxu0 0.0
        %672 = vmatprep.subr.mxu0 0.0
        %673 = vmatpush1.msra.mxu0 0.0
        %674 = vmatprep.mubr.f32.mxu0 0.0
        %675 = vmatmul.mubr.f32.gmra.mrb[0].mxu0 %v608
        %v676 = vpop.f32.mrb[0].mxu0
        %v677 = vadd.f32 %v600, %v676
        %v678 = vpop.f32.mrb[0].mxu0
        %v679 = vadd.f32 %v604, %v678
        %680 = vdwg.mxu0
        %682 = vrot.lane.b32.xlu0 %v677, 64
        %v683 = vpop.permute.xlu0 %682
        %vm684 = vcmask 261120
        %v685 = vsel %vm684, %v683, 0
        %v687 = vsel %vm684, %v677, 0
        %689 = vmatprep.subr.mxu0 0.0
        %690 = vmatpush1.xpose.msra.mxu0 %v687
        %691 = vmatprep.subr.mxu0 0.0
        %692 = vmatpush1.xpose.msra.mxu0 0.0
        %693 = vmatprep.subr.mxu0 0.0
        %694 = vmatpush1.xpose.msra.mxu0 0.0
        %695 = vmatprep.subr.mxu0 0.0
        %696 = vmatpush1.xpose.msra.mxu0 0.0
        %697 = vmatprep.subr.mxu0 0.0
        %698 = vmatpush1.xpose.msra.mxu0 0.0
        %699 = vmatprep.subr.mxu0 0.0
        %700 = vmatpush1.xpose.msra.mxu0 0.0
        %701 = vmatprep.subr.mxu0 0.0
        %702 = vmatpush1.xpose.msra.mxu0 0.0
        %703 = vmatprep.subr.mxu0 0.0
        %704 = vmatpush1.xpose.msra.mxu0 0.0
        %705 = vmatprep.subr.mxu0 0.0
        %706 = vmatpush1.xpose.msra.mxu0 0.0
        %707 = vmatprep.subr.mxu0 0.0
        %708 = vmatpush1.xpose.msra.mxu0 0.0
        %709 = vmatprep.subr.mxu0 0.0
        %710 = vmatpush1.xpose.msra.mxu0 0.0
        %711 = vmatprep.subr.mxu0 0.0
        %712 = vmatpush1.xpose.msra.mxu0 0.0
        %713 = vmatprep.subr.mxu0 0.0
        %714 = vmatpush1.xpose.msra.mxu0 0.0
        %715 = vmatprep.subr.mxu0 0.0
        %716 = vmatpush1.xpose.msra.mxu0 0.0
        %717 = vmatprep.subr.mxu0 0.0
        %718 = vmatpush1.xpose.msra.mxu0 0.0
        %719 = vmatprep.subr.mxu0 0.0
        %720 = vmatpush1.xpose.msra.mxu0 0.0
        %721 = vmatprep.subr.mxu0 0.0
        %722 = vmatpush1.xpose.msra.mxu0 0.0
        %723 = vmatprep.subr.mxu0 0.0
        %724 = vmatpush1.xpose.msra.mxu0 0.0
        %725 = vmatprep.subr.mxu0 0.0
        %726 = vmatpush1.xpose.msra.mxu0 0.0
        %727 = vmatprep.subr.mxu0 0.0
        %728 = vmatpush1.xpose.msra.mxu0 0.0
        %729 = vmatprep.subr.mxu0 0.0
        %730 = vmatpush1.xpose.msra.mxu0 0.0
        %731 = vmatprep.subr.mxu0 0.0
        %732 = vmatpush1.xpose.msra.mxu0 0.0
        %733 = vmatprep.subr.mxu0 0.0
        %734 = vmatpush1.xpose.msra.mxu0 0.0
        %735 = vmatprep.subr.mxu0 0.0
        %736 = vmatpush1.xpose.msra.mxu0 0.0
        %737 = vmatprep.subr.mxu0 0.0
        %738 = vmatpush1.xpose.msra.mxu0 0.0
        %739 = vmatprep.subr.mxu0 0.0
        %740 = vmatpush1.xpose.msra.mxu0 0.0
        %741 = vmatprep.subr.mxu0 0.0
        %742 = vmatpush1.xpose.msra.mxu0 0.0
        %743 = vmatprep.subr.mxu0 0.0
        %744 = vmatpush1.xpose.msra.mxu0 0.0
        %745 = vmatprep.subr.mxu0 0.0
        %746 = vmatpush1.xpose.msra.mxu0 0.0
        %747 = vmatprep.subr.mxu0 0.0
        %748 = vmatpush1.xpose.msra.mxu0 0.0
        %749 = vmatprep.subr.mxu0 0.0
        %750 = vmatpush1.xpose.msra.mxu0 0.0
        %751 = vmatprep.subr.mxu0 0.0
        %752 = vmatpush1.xpose.msra.mxu0 0.0
        %753 = vmatprep.mubr.f32.mxu0 0.0
        %754 = vmatmul.mubr.f32.gmra.mrb[0].mxu0 %v685
        %v755 = vpop.f32.mrb[0].mxu0
        %v756 = vadd.f32 0.0, %v755
        %v757 = vpop.f32.mrb[0].mxu0
        %758 = vdwg.mxu0
        %v759 = vmul.f32 %v756, 0.17677669
        %v760 = vsel %vm311, %v759, -inf
        %761 = vmax.xlane.f32.xlu0 %v760
        %v762 = vpop.xlane.xlu0 %761
        %v763 = vsub.f32 %v759, %v762
        %v764 = vmul.f32 %v763, 1.442695
        %v765 = vpow.pop %v764
        %v766 = vsel %vm311, %v765, 0.0
        %767 = vadd.xlane.f32.xlu0 %v766
        %v768 = vpop.xlane.xlu0 %767
        %v769 = vrcp.pop %v768
        %v770 = vmul.f32 %v765, %v769
        %v772 = vsel %vm311, %v770, 0
        %774 = vmatprep.subr.mxu0 0.0
        %775 = vmatpush1.msra.mxu0 %v679
        %776 = vmatprep.subr.mxu0 0.0
        %777 = vmatpush1.msra.mxu0 0.0
        %778 = vmatprep.subr.mxu0 0.0
        %779 = vmatpush1.msra.mxu0 0.0
        %780 = vmatprep.subr.mxu0 0.0
        %781 = vmatpush1.msra.mxu0 0.0
        %782 = vmatprep.subr.mxu0 0.0
        %783 = vmatpush1.msra.mxu0 0.0
        %784 = vmatprep.subr.mxu0 0.0
        %785 = vmatpush1.msra.mxu0 0.0
        %786 = vmatprep.subr.mxu0 0.0
        %787 = vmatpush1.msra.mxu0 0.0
        %788 = vmatprep.subr.mxu0 0.0
        %789 = vmatpush1.msra.mxu0 0.0
        %790 = vmatprep.subr.mxu0 0.0
        %791 = vmatpush1.msra.mxu0 0.0
        %792 = vmatprep.subr.mxu0 0.0
        %793 = vmatpush1.msra.mxu0 0.0
        %794 = vmatprep.subr.mxu0 0.0
        %795 = vmatpush1.msra.mxu0 0.0
        %796 = vmatprep.subr.mxu0 0.0
        %797 = vmatpush1.msra.mxu0 0.0
        %798 = vmatprep.subr.mxu0 0.0
        %799 = vmatpush1.msra.mxu0 0.0
        %800 = vmatprep.subr.mxu0 0.0
        %801 = vmatpush1.msra.mxu0 0.0
        %802 = vmatprep.subr.mxu0 0.0
        %803 = vmatpush1.msra.mxu0 0.0
        %804 = vmatprep.subr.mxu0 0.0
        %805 = vmatpush1.msra.mxu0 0.0
        %806 = vmatprep.subr.mxu0 0.0
        %807 = vmatpush1.msra.mxu0 0.0
        %808 = vmatprep.subr.mxu0 0.0
        %809 = vmatpush1.msra.mxu0 0.0
        %810 = vmatprep.subr.mxu0 0.0
        %811 = vmatpush1.msra.mxu0 0.0
        %812 = vmatprep.subr.mxu0 0.0
        %813 = vmatpush1.msra.mxu0 0.0
        %814 = vmatprep.subr.mxu0 0.0
        %815 = vmatpush1.msra.mxu0 0.0
        %816 = vmatprep.subr.mxu0 0.0
        %817 = vmatpush1.msra.mxu0 0.0
        %818 = vmatprep.subr.mxu0 0.0
        %819 = vmatpush1.msra.mxu0 0.0
        %820 = vmatprep.subr.mxu0 0.0
        %821 = vmatpush1.msra.mxu0 0.0
        %822 = vmatprep.subr.mxu0 0.0
        %823 = vmatpush1.msra.mxu0 0.0
        %824 = vmatprep.subr.mxu0 0.0
        %825 = vmatpush1.msra.mxu0 0.0
        %826 = vmatprep.subr.mxu0 0.0
        %827 = vmatpush1.msra.mxu0 0.0
        %828 = vmatprep.subr.mxu0 0.0
        %829 = vmatpush1.msra.mxu0 0.0
        %830 = vmatprep.subr.mxu0 0.0
        %831 = vmatpush1.msra.mxu0 0.0
        %832 = vmatprep.subr.mxu0 0.0
        %833 = vmatpush1.msra.mxu0 0.0
        %834 = vmatprep.subr.mxu0 0.0
        %835 = vmatpush1.msra.mxu0 0.0
        %836 = vmatprep.subr.mxu0 0.0
        %837 = vmatpush1.msra.mxu0 0.0
        %838 = vmatprep.mubr.f32.mxu0 0.0
        %839 = vmatmul.mubr.f32.gmra.mrb[0].mxu0 %v772
        %v840 = vpop.f32.mrb[0].mxu0
        %v841 = vadd.f32 0.0, %v840
        %v842 = vpop.f32.mrb[0].mxu0
        %843 = vdwg.mxu0
        %v844 = vld [vmem:[%s6] sm:$0xff]
        %v845 = vld [vmem:[%s6 + $0x8] sm:$0xff]
        %v846 = vld [vmem:[%s6 + $0x10] sm:$0xff]
        %v847 = vld [vmem:[%s6 + $0x18] sm:$0xff]
        %848 = vrot.lane.b32.xlu0 %v677, 32
        %v849 = vpop.permute.xlu0 %848
        %850 = vrot.lane.b32.xlu0 %v677, 96
        %v851 = vpop.permute.xlu0 %850
        %v852 = vsel %vm684, %v849, 0
        %v854 = vsel %vm684, %v851, 0
        %856 = vmatprep.subr.mxu0 0.0
        %857 = vmatpush1.xpose.msra.mxu0 %v854
        %858 = vmatprep.subr.mxu0 0.0
        %859 = vmatpush1.xpose.msra.mxu0 0.0
        %860 = vmatprep.subr.mxu0 0.0
        %861 = vmatpush1.xpose.msra.mxu0 0.0
        %862 = vmatprep.subr.mxu0 0.0
        %863 = vmatpush1.xpose.msra.mxu0 0.0
        %864 = vmatprep.subr.mxu0 0.0
        %865 = vmatpush1.xpose.msra.mxu0 0.0
        %866 = vmatprep.subr.mxu0 0.0
        %867 = vmatpush1.xpose.msra.mxu0 0.0
        %868 = vmatprep.subr.mxu0 0.0
        %869 = vmatpush1.xpose.msra.mxu0 0.0
        %870 = vmatprep.subr.mxu0 0.0
        %871 = vmatpush1.xpose.msra.mxu0 0.0
        %872 = vmatprep.subr.mxu0 0.0
        %873 = vmatpush1.xpose.msra.mxu0 0.0
        %874 = vmatprep.subr.mxu0 0.0
        %875 = vmatpush1.xpose.msra.mxu0 0.0
        %876 = vmatprep.subr.mxu0 0.0
        %877 = vmatpush1.xpose.msra.mxu0 0.0
        %878 = vmatprep.subr.mxu0 0.0
        %879 = vmatpush1.xpose.msra.mxu0 0.0
        %880 = vmatprep.subr.mxu0 0.0
        %881 = vmatpush1.xpose.msra.mxu0 0.0
        %882 = vmatprep.subr.mxu0 0.0
        %883 = vmatpush1.xpose.msra.mxu0 0.0
        %884 = vmatprep.subr.mxu0 0.0
        %885 = vmatpush1.xpose.msra.mxu0 0.0
        %886 = vmatprep.subr.mxu0 0.0
        %887 = vmatpush1.xpose.msra.mxu0 0.0
        %888 = vmatprep.subr.mxu0 0.0
        %889 = vmatpush1.xpose.msra.mxu0 0.0
        %890 = vmatprep.subr.mxu0 0.0
        %891 = vmatpush1.xpose.msra.mxu0 0.0
        %892 = vmatprep.subr.mxu0 0.0
        %893 = vmatpush1.xpose.msra.mxu0 0.0
        %894 = vmatprep.subr.mxu0 0.0
        %895 = vmatpush1.xpose.msra.mxu0 0.0
        %896 = vmatprep.subr.mxu0 0.0
        %897 = vmatpush1.xpose.msra.mxu0 0.0
        %898 = vmatprep.subr.mxu0 0.0
        %899 = vmatpush1.xpose.msra.mxu0 0.0
        %900 = vmatprep.subr.mxu0 0.0
        %901 = vmatpush1.xpose.msra.mxu0 0.0
        %902 = vmatprep.subr.mxu0 0.0
        %903 = vmatpush1.xpose.msra.mxu0 0.0
        %904 = vmatprep.subr.mxu0 0.0
        %905 = vmatpush1.xpose.msra.mxu0 0.0
        %906 = vmatprep.subr.mxu0 0.0
        %907 = vmatpush1.xpose.msra.mxu0 0.0
        %908 = vmatprep.subr.mxu0 0.0
        %909 = vmatpush1.xpose.msra.mxu0 0.0
        %910 = vmatprep.subr.mxu0 0.0
        %911 = vmatpush1.xpose.msra.mxu0 0.0
        %912 = vmatprep.subr.mxu0 0.0
        %913 = vmatpush1.xpose.msra.mxu0 0.0
        %914 = vmatprep.subr.mxu0 0.0
        %915 = vmatpush1.xpose.msra.mxu0 0.0
        %916 = vmatprep.subr.mxu0 0.0
        %917 = vmatpush1.xpose.msra.mxu0 0.0
        %918 = vmatprep.subr.mxu0 0.0
        %919 = vmatpush1.xpose.msra.mxu0 0.0
        %920 = vmatprep.mubr.f32.mxu0 0.0
        %921 = vmatmul.mubr.f32.gmra.mrb[0].mxu0 %v852
        %v922 = vpop.f32.mrb[0].mxu0
        %v923 = vadd.f32 0.0, %v922
        %v924 = vpop.f32.mrb[0].mxu0
        %925 = vdwg.mxu0
        %v926 = vmul.f32 %v923, 0.17677669
        %v927 = vsel %vm311, %v926, -inf
        %928 = vmax.xlane.f32.xlu0 %v927
        %v929 = vpop.xlane.xlu0 %928
        %v930 = vsub.f32 %v926, %v929
        %v931 = vmul.f32 %v930, 1.442695
        %v932 = vpow.pop %v931
        %v933 = vsel %vm311, %v932, 0.0
        %934 = vadd.xlane.f32.xlu0 %v933
        %v935 = vpop.xlane.xlu0 %934
        %v936 = vrcp.pop %v935
        %v937 = vmul.f32 %v932, %v936
        %939 = vrot.lane.b32.xlu0 %v679, 96
        %v940 = vpop.permute.xlu0 %939
        %v943 = vsel %vm311, %v937, 0
        %945 = vmatprep.subr.mxu0 0.0
        %946 = vmatpush1.msra.mxu0 %v940
        %947 = vmatprep.subr.mxu0 0.0
        %948 = vmatpush1.msra.mxu0 0.0
        %949 = vmatprep.subr.mxu0 0.0
        %950 = vmatpush1.msra.mxu0 0.0
        %951 = vmatprep.subr.mxu0 0.0
        %952 = vmatpush1.msra.mxu0 0.0
        %953 = vmatprep.subr.mxu0 0.0
        %954 = vmatpush1.msra.mxu0 0.0
        %955 = vmatprep.subr.mxu0 0.0
        %956 = vmatpush1.msra.mxu0 0.0
        %957 = vmatprep.subr.mxu0 0.0
        %958 = vmatpush1.msra.mxu0 0.0
        %959 = vmatprep.subr.mxu0 0.0
        %960 = vmatpush1.msra.mxu0 0.0
        %961 = vmatprep.subr.mxu0 0.0
        %962 = vmatpush1.msra.mxu0 0.0
        %963 = vmatprep.subr.mxu0 0.0
        %964 = vmatpush1.msra.mxu0 0.0
        %965 = vmatprep.subr.mxu0 0.0
        %966 = vmatpush1.msra.mxu0 0.0
        %967 = vmatprep.subr.mxu0 0.0
        %968 = vmatpush1.msra.mxu0 0.0
        %969 = vmatprep.subr.mxu0 0.0
        %970 = vmatpush1.msra.mxu0 0.0
        %971 = vmatprep.subr.mxu0 0.0
        %972 = vmatpush1.msra.mxu0 0.0
        %973 = vmatprep.subr.mxu0 0.0
        %974 = vmatpush1.msra.mxu0 0.0
        %975 = vmatprep.subr.mxu0 0.0
        %976 = vmatpush1.msra.mxu0 0.0
        %977 = vmatprep.subr.mxu0 0.0
        %978 = vmatpush1.msra.mxu0 0.0
        %979 = vmatprep.subr.mxu0 0.0
        %980 = vmatpush1.msra.mxu0 0.0
        %981 = vmatprep.subr.mxu0 0.0
        %982 = vmatpush1.msra.mxu0 0.0
        %983 = vmatprep.subr.mxu0 0.0
        %984 = vmatpush1.msra.mxu0 0.0
        %985 = vmatprep.subr.mxu0 0.0
        %986 = vmatpush1.msra.mxu0 0.0
        %987 = vmatprep.subr.mxu0 0.0
        %988 = vmatpush1.msra.mxu0 0.0
        %989 = vmatprep.subr.mxu0 0.0
        %990 = vmatpush1.msra.mxu0 0.0
        %991 = vmatprep.subr.mxu0 0.0
        %992 = vmatpush1.msra.mxu0 0.0
        %993 = vmatprep.subr.mxu0 0.0
        %994 = vmatpush1.msra.mxu0 0.0
        %995 = vmatprep.subr.mxu0 0.0
        %996 = vmatpush1.msra.mxu0 0.0
        %997 = vmatprep.subr.mxu0 0.0
        %998 = vmatpush1.msra.mxu0 0.0
        %999 = vmatprep.subr.mxu0 0.0
        %1000 = vmatpush1.msra.mxu0 0.0
        %1001 = vmatprep.subr.mxu0 0.0
        %1002 = vmatpush1.msra.mxu0 0.0
        %1003 = vmatprep.subr.mxu0 0.0
        %1004 = vmatpush1.msra.mxu0 0.0
        %1005 = vmatprep.subr.mxu0 0.0
        %1006 = vmatpush1.msra.mxu0 0.0
        %1007 = vmatprep.subr.mxu0 0.0
        %1008 = vmatpush1.msra.mxu0 0.0
        %1009 = vmatprep.mubr.f32.mxu0 0.0
        %1010 = vmatmul.mubr.f32.gmra.mrb[0].mxu0 %v943
        %v1011 = vpop.f32.mrb[0].mxu0
        %v1012 = vadd.f32 0.0, %v1011
        %v1013 = vpop.f32.mrb[0].mxu0
        %1014 = vdwg.mxu0
        %v1015 = vld [vmem:[%s6 + $0x20] sm:$0xff]
        %v1016 = vld [vmem:[%s6 + $0x28] sm:$0xff]
        %v1017 = vld [vmem:[%s6 + $0x30] sm:$0xff]
        %v1018 = vld [vmem:[%s6 + $0x38] sm:$0xff]
        %v1020 = vsel %vm684, %v1012, 0
        %1022 = vmatprep.subr.mxu0 0.0
        %1023 = vmatpush1.msra.mxu0 %v1015
        %1024 = vmatprep.subr.mxu0 0.0
        %1025 = vmatpush1.msra.mxu0 %v1016
        %1026 = vmatprep.subr.mxu0 0.0
        %1027 = vmatpush1.msra.mxu0 %v1017
        %1028 = vmatprep.subr.mxu0 0.0
        %1029 = vmatpush1.msra.mxu0 %v1018
        %1030 = vmatprep.subr.mxu0 0.0
        %1031 = vmatpush1.msra.mxu0 0.0
        %1032 = vmatprep.subr.mxu0 0.0
        %1033 = vmatpush1.msra.mxu0 0.0
        %1034 = vmatprep.subr.mxu0 0.0
        %1035 = vmatpush1.msra.mxu0 0.0
        %1036 = vmatprep.subr.mxu0 0.0
        %1037 = vmatpush1.msra.mxu0 0.0
        %1038 = vmatprep.subr.mxu0 0.0
        %1039 = vmatpush1.msra.mxu0 0.0
        %1040 = vmatprep.subr.mxu0 0.0
        %1041 = vmatpush1.msra.mxu0 0.0
        %1042 = vmatprep.subr.mxu0 0.0
        %1043 = vmatpush1.msra.mxu0 0.0
        %1044 = vmatprep.subr.mxu0 0.0
        %1045 = vmatpush1.msra.mxu0 0.0
        %1046 = vmatprep.subr.mxu0 0.0
        %1047 = vmatpush1.msra.mxu0 0.0
        %1048 = vmatprep.subr.mxu0 0.0
        %1049 = vmatpush1.msra.mxu0 0.0
        %1050 = vmatprep.subr.mxu0 0.0
        %1051 = vmatpush1.msra.mxu0 0.0
        %1052 = vmatprep.subr.mxu0 0.0
        %1053 = vmatpush1.msra.mxu0 0.0
        %1054 = vmatprep.subr.mxu0 0.0
        %1055 = vmatpush1.msra.mxu0 0.0
        %1056 = vmatprep.subr.mxu0 0.0
        %1057 = vmatpush1.msra.mxu0 0.0
        %1058 = vmatprep.subr.mxu0 0.0
        %1059 = vmatpush1.msra.mxu0 0.0
        %1060 = vmatprep.subr.mxu0 0.0
        %1061 = vmatpush1.msra.mxu0 0.0
        %1062 = vmatprep.subr.mxu0 0.0
        %1063 = vmatpush1.msra.mxu0 0.0
        %1064 = vmatprep.subr.mxu0 0.0
        %1065 = vmatpush1.msra.mxu0 0.0
        %1066 = vmatprep.subr.mxu0 0.0
        %1067 = vmatpush1.msra.mxu0 0.0
        %1068 = vmatprep.subr.mxu0 0.0
        %1069 = vmatpush1.msra.mxu0 0.0
        %1070 = vmatprep.subr.mxu0 0.0
        %1071 = vmatpush1.msra.mxu0 0.0
        %1072 = vmatprep.subr.mxu0 0.0
        %1073 = vmatpush1.msra.mxu0 0.0
        %1074 = vmatprep.subr.mxu0 0.0
        %1075 = vmatpush1.msra.mxu0 0.0
        %1076 = vmatprep.subr.mxu0 0.0
        %1077 = vmatpush1.msra.mxu0 0.0
        %1078 = vmatprep.subr.mxu0 0.0
        %1079 = vmatpush1.msra.mxu0 0.0
        %1080 = vmatprep.subr.mxu0 0.0
        %1081 = vmatpush1.msra.mxu0 0.0
        %1082 = vmatprep.subr.mxu0 0.0
        %1083 = vmatpush1.msra.mxu0 0.0
        %1084 = vmatprep.subr.mxu0 0.0
        %1085 = vmatpush1.msra.mxu0 0.0
        %1086 = vmatprep.mubr.f32.mxu0 0.0
        %1087 = vmatmul.mubr.f32.gmra.mrb[0].mxu0 %v1020
        %v1088 = vpop.f32.mrb[0].mxu0
        %v1089 = vadd.f32 0.0, %v1088
        %v1090 = vpop.f32.mrb[0].mxu0
        %1091 = vdwg.mxu0
        %v1093 = vsel %vm684, %v841, 0
        %1095 = vmatprep.subr.mxu0 0.0
        %1096 = vmatpush1.msra.mxu0 %v844
        %1097 = vmatprep.subr.mxu0 0.0
        %1098 = vmatpush1.msra.mxu0 %v845
        %1099 = vmatprep.subr.mxu0 0.0
        %1100 = vmatpush1.msra.mxu0 %v846
        %1101 = vmatprep.subr.mxu0 0.0
        %1102 = vmatpush1.msra.mxu0 %v847
        %1103 = vmatprep.subr.mxu0 0.0
        %1104 = vmatpush1.msra.mxu0 0.0
        %1105 = vmatprep.subr.mxu0 0.0
        %1106 = vmatpush1.msra.mxu0 0.0
        %1107 = vmatprep.subr.mxu0 0.0
        %1108 = vmatpush1.msra.mxu0 0.0
        %1109 = vmatprep.subr.mxu0 0.0
        %1110 = vmatpush1.msra.mxu0 0.0
        %1111 = vmatprep.subr.mxu0 0.0
        %1112 = vmatpush1.msra.mxu0 0.0
        %1113 = vmatprep.subr.mxu0 0.0
        %1114 = vmatpush1.msra.mxu0 0.0
        %1115 = vmatprep.subr.mxu0 0.0
        %1116 = vmatpush1.msra.mxu0 0.0
        %1117 = vmatprep.subr.mxu0 0.0
        %1118 = vmatpush1.msra.mxu0 0.0
        %1119 = vmatprep.subr.mxu0 0.0
        %1120 = vmatpush1.msra.mxu0 0.0
        %1121 = vmatprep.subr.mxu0 0.0
        %1122 = vmatpush1.msra.mxu0 0.0
        %1123 = vmatprep.subr.mxu0 0.0
        %1124 = vmatpush1.msra.mxu0 0.0
        %1125 = vmatprep.subr.mxu0 0.0
        %1126 = vmatpush1.msra.mxu0 0.0
        %1127 = vmatprep.subr.mxu0 0.0
        %1128 = vmatpush1.msra.mxu0 0.0
        %1129 = vmatprep.subr.mxu0 0.0
        %1130 = vmatpush1.msra.mxu0 0.0
        %1131 = vmatprep.subr.mxu0 0.0
        %1132 = vmatpush1.msra.mxu0 0.0
        %1133 = vmatprep.subr.mxu0 0.0
        %1134 = vmatpush1.msra.mxu0 0.0
        %1135 = vmatprep.subr.mxu0 0.0
        %1136 = vmatpush1.msra.mxu0 0.0
        %1137 = vmatprep.subr.mxu0 0.0
        %1138 = vmatpush1.msra.mxu0 0.0
        %1139 = vmatprep.subr.mxu0 0.0
        %1140 = vmatpush1.msra.mxu0 0.0
        %1141 = vmatprep.subr.mxu0 0.0
        %1142 = vmatpush1.msra.mxu0 0.0
        %1143 = vmatprep.subr.mxu0 0.0
        %1144 = vmatpush1.msra.mxu0 0.0
        %1145 = vmatprep.subr.mxu0 0.0
        %1146 = vmatpush1.msra.mxu0 0.0
        %1147 = vmatprep.subr.mxu0 0.0
        %1148 = vmatpush1.msra.mxu0 0.0
        %1149 = vmatprep.subr.mxu0 0.0
        %1150 = vmatpush1.msra.mxu0 0.0
        %1151 = vmatprep.subr.mxu0 0.0
        %1152 = vmatpush1.msra.mxu0 0.0
        %1153 = vmatprep.subr.mxu0 0.0
        %1154 = vmatpush1.msra.mxu0 0.0
        %1155 = vmatprep.subr.mxu0 0.0
        %1156 = vmatpush1.msra.mxu0 0.0
        %1157 = vmatprep.subr.mxu0 0.0
        %1158 = vmatpush1.msra.mxu0 0.0
        %1159 = vmatprep.mubr.f32.mxu0 0.0
        %1160 = vmatmul.mubr.f32.gmra.mrb[0].mxu0 %v1093
        %v1161 = vpop.f32.mrb[0].mxu0
        %v1162 = vadd.f32 %v1089, %v1161
        %v1163 = vpop.f32.mrb[0].mxu0
        %1164 = vdwg.mxu0
        %v1165 = vld [vmem:[%s7] sm:$0x1]
        %v1167 = vlaneseq
        %v1168 = vshrl.u32 %v1167, 7
        %v1169 = vsub.s32 0, %v1168
        %v1170 = vrot.slane %v1165, %v1169
        %v1172 = vadd.f32 %v1162, %v1170
        %1173 = vst.msk [vmem:[%s298] sm:$0xff] %vm454, %v1172
        %s1174 = sand.u32 %s205, 1
        %s1175 = scalar_lea.sflag [#allocation4], %s1174
        %s1176 = sand.u32 %s205, 1
        %s1177 = smul.addr %s1176, 8
        %s1178 = scalar_lea.vmem [#allocation3], %s1177
        // Predicated region
        $region53: #{cau_forward.1} parent=51 // pred_check
          %p1179 = pneg %p215
        $region54: #{cau_forward.1} parent=51 // pred_check_branch
          %1181 = sbr.rel (%p1179) target = $region56
        $region55: #{cau_forward.1} parent=51 // pred_region
          %s1183 = ssub.s32 128, 128
          %1184 = vsyncadd %s1175, %s1183
          %s1185 = smul.addr %s24, 128
          %s1186 = scalar_lea.hbm %s8, %s1185
          %s1188 = sshll.u32 %s1178, 4
          %s1189 = int_to_ptr.vmem [resolvable:$true] %s1188
          %1191 = dma.vmem_to_hbm [thread:$0]  %s1189, 128, %s1186, %s1175
        $region56: #{cau_forward.1} parent=51 // pred_fallthru
          _
      $region52: #{cau_forward.1} parent=5 // pred_fallthru
        _
      %p1192 = scmp.le.s32.totalorder 2, %s19
      // Predicated region
      $region57: #{cau_forward.1} parent=5 // pred_check
        %p1193 = pneg %p1192
      $region58: #{cau_forward.1} parent=5 // pred_check_branch
        %1195 = sbr.rel (%p1193) target = $region60
      $region59: #{cau_forward.1} parent=5 // pred_region
        %s1196 = ssub.s32 %s19, 2
        // Predicated region
        $region61: #{cau_forward.1} parent=59 // pred_check
          %p1197 = pneg %p221
        $region62: #{cau_forward.1} parent=59 // pred_check_branch
          %1199 = sbr.rel (%p1197) target = $region64
        $region63: #{cau_forward.1} parent=59 // pred_region
          %s1200 = sand.u32 %s206, 1
          %s1201 = scalar_lea.sflag [#allocation4], %s1200
          %s1202 = sand.u32 %s206, 1
          %s1203 = smul.addr %s1202, 8
          %s1204 = scalar_lea.vmem [#allocation3], %s1203
          %1205 = dma.done %s1201, 128
        $region64: #{cau_forward.1} parent=59 // pred_fallthru
          _
      $region60: #{cau_forward.1} parent=5 // pred_fallthru
        _
    $region6: #{cau_forward.1} parent=1 // loop_footer
      %s23 = sadd.s32 1, %s19
    $region7: #{cau_forward.1} parent=1 // loop_footer_branch
      %18 = sbr.rel target = $region3
    $region8: #{cau_forward.1} parent=1 // loop_exit
      _
    %1206 = vsyncpa [#allocation4], 1
    %s1207 = scalar_lea.sflag [#allocation4], 1
    %1208 = vsyncpa %s1207, 1

</llo_original>
